<compile_context>
chip_gen: v6e
topology: v6e:2x2x1
jax: 0.10.0
libtpu: 0.0.40
codegen_flags: <defaults>
</compile_context>

<pallas_src>
import jax
import jax.numpy as jnp
from jax.experimental import pallas as pl
from jax.experimental.pallas import tpu as pltpu


def _adaptive_bins(in_size: int, out_size: int):
    """PyTorch adaptive-pooling bin boundaries: [floor(i*I/O), ceil((i+1)*I/O))."""
    bins = []
    for i in range(out_size):
        start = (i * in_size) // out_size
        end = -((-(i + 1) * in_size) // out_size)  # ceil((i+1)*in/out)
        bins.append((start, end))
    return bins


def _round_up(v: int, m: int) -> int:
    return -(-v // m) * m


def _sublane_pack(itemsize: int) -> int:
    # f32 tiles are (8,128), bf16/f16 (16,128), int8/fp8 (32,128).
    return {4: 8, 2: 16, 1: 32}.get(itemsize, 8)


def _block_bytes(nb, cb, H, W, OH, OW, itemsize):
    """VMEM footprint of one input block + one output block (single buffer)."""
    sub = _sublane_pack(itemsize)
    in_b = nb * cb * _round_up(H, sub) * _round_up(W, 128) * itemsize
    out_b = nb * 2 * cb * _round_up(OH, sub) * _round_up(OW, 128) * itemsize
    return in_b + out_b


def _largest_divisor_leq(n: int, cap: int) -> int:
    cap = max(1, min(cap, n))
    best = 1
    for d in range(1, cap + 1):
        if n % d == 0:
            best = d
    return best


def _vmem_budget():
    """Return (vmem_limit_bytes, per-buffer block budget) for this TPU gen."""
    phys = None
    try:
        phys = getattr(pltpu.get_tpu_info(), "vmem_capacity_bytes", None)
    except Exception:
        phys = None
    if not phys:
        phys = 64 << 20          # assume the smallest-VMEM generation (v7x)
    vmem_limit = int(min(phys // 2, 64 << 20))   # v7x: 32 MiB, v5e/v6e: 64 MiB
    # Double-buffered (input + output) blocks must fit with headroom for
    # compiler-internal scratch: 2 * budget <= 0.75 * vmem_limit.
    budget = min((vmem_limit * 3 // 4) // 2, 16 << 20)
    return vmem_limit, budget


def _pick_blocks(N, C, H, W, OH, OW, itemsize, budget):
    """Choose (NB, CB): batch/channel tile sizes (divisors of N / C)."""
    per_c = _block_bytes(1, 1, H, W, OH, OW, itemsize)
    CB = _largest_divisor_leq(C, max(1, budget // per_c))
    # TODO(synk): add spatial (H) tiling for single planes larger than VMEM.
    NB = 1
    if CB == C:
        per_img = _block_bytes(1, C, H, W, OH, OW, itemsize)
        NB = _largest_divisor_leq(N, max(1, budget // per_img))
    # Megacore: v7x has 2 TensorCores -- make sure the (fully parallel) grid
    # has at least 2 steps whenever the problem can be split.
    if (N // NB) * (C // CB) < 2:
        if N > 1:
            NB = _largest_divisor_leq(N, N // 2)
        elif C > 1:
            CB = _largest_divisor_leq(C, C // 2)
    return NB, CB


def _make_kernel(H, W, OH, OW):
    h_bins = _adaptive_bins(H, OH)
    w_bins = _adaptive_bins(W, OW)

    def kernel(x_ref, o_ref):
        # x_ref block: (NB, CB, H, W)  -- native NCHW, (H, W) on (sublane, lane).
        # o_ref block: (NB, 2, CB, OH, OW): [:, 0] = max pool, [:, 1] = avg pool.
        row_max = []
        row_avg = []
        for hs, he in h_bins:
            # Fused, chunked H-bin reduction: single pass over the rows, max
            # kept in the native dtype, sum accumulated in f32 (bounded vreg
            # live ranges for tall bins).
            hmax = None
            hsum = None
            r = hs
            while r < he:
                r2 = min(r + 8, he)
                blk = x_ref[:, :, r:r2, :]                        # (NB, CB, <=8, W)
                cmax = jnp.max(blk, axis=2)                       # (NB, CB, W)
                csum = jnp.sum(blk.astype(jnp.float32), axis=2)   # (NB, CB, W)
                hmax = cmax if hmax is None else jnp.maximum(hmax, cmax)
                hsum = csum if hsum is None else hsum + csum
                r = r2
            wmaxs = []
            wavgs = []
            for ws, we in w_bins:
                inv_area = 1.0 / float((he - hs) * (we - ws))     # static constant
                wmaxs.append(jnp.max(hmax[..., ws:we], axis=-1, keepdims=True))
                wavgs.append(jnp.sum(hsum[..., ws:we], axis=-1, keepdims=True)
                             * inv_area)
            row_max.append(jnp.concatenate(wmaxs, axis=-1)[:, :, None, :])
            row_avg.append(jnp.concatenate(wavgs, axis=-1)[:, :, None, :])
        mx = jnp.concatenate(row_max, axis=2)                     # (NB, CB, OH, OW)
        av = jnp.concatenate(row_avg, axis=2)
        # Two batched stores per grid step (no per-bin masked stores).
        o_ref[:, 0, :, :, :] = mx.astype(o_ref.dtype)
        o_ref[:, 1, :, :, :] = av.astype(o_ref.dtype)

    return kernel


def adaptive_concat_pool2d(x, output_size):
    """Pallas TPU forward of AdaptiveConcatPool2d.

    x: (N, C, H, W) -> (N, 2C, OH, OW); channels [:C] = adaptive max pool,
    channels [C:] = adaptive avg pool (PyTorch bin semantics).
    """
    N, C, H, W = x.shape
    if output_size is None or isinstance(output_size, int):
        output_size = (output_size, output_size)
    OH = H if output_size[0] is None else int(output_size[0])
    OW = W if output_size[1] is None else int(output_size[1])

    vmem_limit, budget = _vmem_budget()
    NB, CB = _pick_blocks(N, C, H, W, OH, OW, x.dtype.itemsize, budget)

    kernel = _make_kernel(H, W, OH, OW)

    out5 = pl.pallas_call(
        kernel,
        out_shape=jax.ShapeDtypeStruct((N, 2, C, OH, OW), x.dtype),
        grid=(N // NB, C // CB),
        in_specs=[pl.BlockSpec((NB, CB, H, W), lambda n, c: (n, c, 0, 0))],
        out_specs=pl.BlockSpec((NB, 2, CB, OH, OW), lambda n, c: (n, 0, c, 0, 0)),
        compiler_params=pltpu.CompilerParams(
            dimension_semantics=("parallel", "parallel"),
            vmem_limit_bytes=vmem_limit),
    )(x)

    # (N, 2, C, OH, OW) -> (N, 2C, OH, OW): contiguous dim merge, no data movement.
    # Matches torch.cat([adaptive_max, adaptive_avg], dim=1).
    return out5.reshape(N, 2 * C, OH, OW)


def _reference(x, output_size):
    """Pure-JAX reference with identical adaptive-pool semantics (NCHW)."""
    N, C, H, W = x.shape
    if output_size is None or isinstance(output_size, int):
        output_size = (output_size, output_size)
    OH = H if output_size[0] is None else int(output_size[0])
    OW = W if output_size[1] is None else int(output_size[1])
    h_bins = _adaptive_bins(H, OH)
    w_bins = _adaptive_bins(W, OW)
    mx = jnp.stack(
        [
            jnp.stack(
                [jnp.max(x[:, :, hs:he, ws:we], axis=(2, 3)) for ws, we in w_bins],
                axis=-1,
            )
            for hs, he in h_bins
        ],
        axis=-2,
    )
    av = jnp.stack(
        [
            jnp.stack(
                [jnp.mean(x[:, :, hs:he, ws:we], axis=(2, 3)) for ws, we in w_bins],
                axis=-1,
            )
            for hs, he in h_bins
        ],
        axis=-2,
    )
    return jnp.concatenate([mx, av], axis=1)


if __name__ == "__main__":
    key = jax.random.PRNGKey(0)
    x = jax.random.normal(key, (2, 4, 16, 16), dtype=jnp.float32)

    # Non-trivial adaptive output size (5, 7), like the module docstring example.
    out = adaptive_concat_pool2d(x, (5, 7))
    out = jax.block_until_ready(out)
    ref = _reference(x, (5, 7))
    assert out.shape == (2, 8, 5, 7), out.shape
    assert jnp.allclose(out, ref, atol=1e-5, rtol=1e-5), float(
        jnp.max(jnp.abs(out - ref)))

    # Global-pool head case (output_size = 1), the most common usage.
    out1 = adaptive_concat_pool2d(x, 1)
    out1 = jax.block_until_ready(out1)
    ref1 = _reference(x, 1)
    assert out1.shape == (2, 8, 1, 1), out1.shape
    assert jnp.allclose(out1, ref1, atol=1e-5, rtol=1e-5), float(
        jnp.max(jnp.abs(out1 - ref1)))

    print("KERNEL_OK")
</pallas_src>

<mosaic_0001>
module attributes {stable_mosaic.version = 11 : i64} {
  func.func @kernel(%arg0: i32, %arg1: i32, %arg2: memref<1x4x16x16xf32, #tpu.memory_space<vmem>>, %arg3: memref<1x2x4x5x7xf32, #tpu.memory_space<vmem>>) attributes {dimension_semantics = [#tpu.dimension_semantics<parallel>, #tpu.dimension_semantics<parallel>], iteration_bounds = array<i64: 2, 1>, scalar_prefetch = 0 : i64, scratch_operands = 0 : i64, tpu.core_type = #tpu.core_type<tc>, window_params = [{transform_indices = @transform_0, window_bounds = array<i64: 1, 4, 16, 16>}, {transform_indices = @transform_1, window_bounds = array<i64: 1, 2, 4, 5, 7>}]} {
    %c0 = arith.constant 0 : index
    %c0_0 = arith.constant 0 : index
    %c0_1 = arith.constant 0 : index
    %c0_2 = arith.constant 0 : index
    %0 = vector.load %arg2[%c0, %c0_0, %c0_1, %c0_2] : memref<1x4x16x16xf32, #tpu.memory_space<vmem>>, vector<1x4x4x16xf32>
    %cst = arith.constant dense<0xFF800000> : vector<1x4x16xf32>
    %1 = vector.multi_reduction <maximumf>, %0, %cst [2] : vector<1x4x4x16xf32> to vector<1x4x16xf32>
    %cst_3 = arith.constant dense<0.000000e+00> : vector<1x4x16xf32>
    %2 = vector.multi_reduction <add>, %0, %cst_3 [2] : vector<1x4x4x16xf32> to vector<1x4x16xf32>
    %3 = vector.extract_strided_slice %1 {offsets = [0, 0, 0], sizes = [1, 4, 3], strides = [1, 1, 1]} : vector<1x4x16xf32> to vector<1x4x3xf32>
    %cst_4 = arith.constant dense<0xFF800000> : vector<1x4xf32>
    %4 = vector.multi_reduction <maximumf>, %3, %cst_4 [2] : vector<1x4x3xf32> to vector<1x4xf32>
    %5 = vector.shape_cast %4 : vector<1x4xf32> to vector<1x4x1xf32>
    %6 = vector.extract_strided_slice %2 {offsets = [0, 0, 0], sizes = [1, 4, 3], strides = [1, 1, 1]} : vector<1x4x16xf32> to vector<1x4x3xf32>
    %cst_5 = arith.constant dense<0.000000e+00> : vector<1x4xf32>
    %7 = vector.multi_reduction <add>, %6, %cst_5 [2] : vector<1x4x3xf32> to vector<1x4xf32>
    %8 = vector.shape_cast %7 : vector<1x4xf32> to vector<1x4x1xf32>
    %cst_6 = arith.constant 0.0833333358 : f32
    %9 = vector.broadcast %cst_6 : f32 to vector<1x4x1xf32>
    %10 = arith.mulf %8, %9 : vector<1x4x1xf32>
    %11 = vector.extract_strided_slice %1 {offsets = [0, 0, 2], sizes = [1, 4, 3], strides = [1, 1, 1]} : vector<1x4x16xf32> to vector<1x4x3xf32>
    %cst_7 = arith.constant dense<0xFF800000> : vector<1x4xf32>
    %12 = vector.multi_reduction <maximumf>, %11, %cst_7 [2] : vector<1x4x3xf32> to vector<1x4xf32>
    %13 = vector.shape_cast %12 : vector<1x4xf32> to vector<1x4x1xf32>
    %14 = vector.extract_strided_slice %2 {offsets = [0, 0, 2], sizes = [1, 4, 3], strides = [1, 1, 1]} : vector<1x4x16xf32> to vector<1x4x3xf32>
    %cst_8 = arith.constant dense<0.000000e+00> : vector<1x4xf32>
    %15 = vector.multi_reduction <add>, %14, %cst_8 [2] : vector<1x4x3xf32> to vector<1x4xf32>
    %16 = vector.shape_cast %15 : vector<1x4xf32> to vector<1x4x1xf32>
    %cst_9 = arith.constant 0.0833333358 : f32
    %17 = vector.broadcast %cst_9 : f32 to vector<1x4x1xf32>
    %18 = arith.mulf %16, %17 : vector<1x4x1xf32>
    %19 = vector.extract_strided_slice %1 {offsets = [0, 0, 4], sizes = [1, 4, 3], strides = [1, 1, 1]} : vector<1x4x16xf32> to vector<1x4x3xf32>
    %cst_10 = arith.constant dense<0xFF800000> : vector<1x4xf32>
    %20 = vector.multi_reduction <maximumf>, %19, %cst_10 [2] : vector<1x4x3xf32> to vector<1x4xf32>
    %21 = vector.shape_cast %20 : vector<1x4xf32> to vector<1x4x1xf32>
    %22 = vector.extract_strided_slice %2 {offsets = [0, 0, 4], sizes = [1, 4, 3], strides = [1, 1, 1]} : vector<1x4x16xf32> to vector<1x4x3xf32>
    %cst_11 = arith.constant dense<0.000000e+00> : vector<1x4xf32>
    %23 = vector.multi_reduction <add>, %22, %cst_11 [2] : vector<1x4x3xf32> to vector<1x4xf32>
    %24 = vector.shape_cast %23 : vector<1x4xf32> to vector<1x4x1xf32>
    %cst_12 = arith.constant 0.0833333358 : f32
    %25 = vector.broadcast %cst_12 : f32 to vector<1x4x1xf32>
    %26 = arith.mulf %24, %25 : vector<1x4x1xf32>
    %27 = vector.extract_strided_slice %1 {offsets = [0, 0, 6], sizes = [1, 4, 4], strides = [1, 1, 1]} : vector<1x4x16xf32> to vector<1x4x4xf32>
    %cst_13 = arith.constant dense<0xFF800000> : vector<1x4xf32>
    %28 = vector.multi_reduction <maximumf>, %27, %cst_13 [2] : vector<1x4x4xf32> to vector<1x4xf32>
    %29 = vector.shape_cast %28 : vector<1x4xf32> to vector<1x4x1xf32>
    %30 = vector.extract_strided_slice %2 {offsets = [0, 0, 6], sizes = [1, 4, 4], strides = [1, 1, 1]} : vector<1x4x16xf32> to vector<1x4x4xf32>
    %cst_14 = arith.constant dense<0.000000e+00> : vector<1x4xf32>
    %31 = vector.multi_reduction <add>, %30, %cst_14 [2] : vector<1x4x4xf32> to vector<1x4xf32>
    %32 = vector.shape_cast %31 : vector<1x4xf32> to vector<1x4x1xf32>
    %cst_15 = arith.constant 6.250000e-02 : f32
    %33 = vector.broadcast %cst_15 : f32 to vector<1x4x1xf32>
    %34 = arith.mulf %32, %33 : vector<1x4x1xf32>
    %35 = vector.extract_strided_slice %1 {offsets = [0, 0, 9], sizes = [1, 4, 3], strides = [1, 1, 1]} : vector<1x4x16xf32> to vector<1x4x3xf32>
    %cst_16 = arith.constant dense<0xFF800000> : vector<1x4xf32>
    %36 = vector.multi_reduction <maximumf>, %35, %cst_16 [2] : vector<1x4x3xf32> to vector<1x4xf32>
    %37 = vector.shape_cast %36 : vector<1x4xf32> to vector<1x4x1xf32>
    %38 = vector.extract_strided_slice %2 {offsets = [0, 0, 9], sizes = [1, 4, 3], strides = [1, 1, 1]} : vector<1x4x16xf32> to vector<1x4x3xf32>
    %cst_17 = arith.constant dense<0.000000e+00> : vector<1x4xf32>
    %39 = vector.multi_reduction <add>, %38, %cst_17 [2] : vector<1x4x3xf32> to vector<1x4xf32>
    %40 = vector.shape_cast %39 : vector<1x4xf32> to vector<1x4x1xf32>
    %cst_18 = arith.constant 0.0833333358 : f32
    %41 = vector.broadcast %cst_18 : f32 to vector<1x4x1xf32>
    %42 = arith.mulf %40, %41 : vector<1x4x1xf32>
    %43 = vector.extract_strided_slice %1 {offsets = [0, 0, 11], sizes = [1, 4, 3], strides = [1, 1, 1]} : vector<1x4x16xf32> to vector<1x4x3xf32>
    %cst_19 = arith.constant dense<0xFF800000> : vector<1x4xf32>
    %44 = vector.multi_reduction <maximumf>, %43, %cst_19 [2] : vector<1x4x3xf32> to vector<1x4xf32>
    %45 = vector.shape_cast %44 : vector<1x4xf32> to vector<1x4x1xf32>
    %46 = vector.extract_strided_slice %2 {offsets = [0, 0, 11], sizes = [1, 4, 3], strides = [1, 1, 1]} : vector<1x4x16xf32> to vector<1x4x3xf32>
    %cst_20 = arith.constant dense<0.000000e+00> : vector<1x4xf32>
    %47 = vector.multi_reduction <add>, %46, %cst_20 [2] : vector<1x4x3xf32> to vector<1x4xf32>
    %48 = vector.shape_cast %47 : vector<1x4xf32> to vector<1x4x1xf32>
    %cst_21 = arith.constant 0.0833333358 : f32
    %49 = vector.broadcast %cst_21 : f32 to vector<1x4x1xf32>
    %50 = arith.mulf %48, %49 : vector<1x4x1xf32>
    %51 = vector.extract_strided_slice %1 {offsets = [0, 0, 13], sizes = [1, 4, 3], strides = [1, 1, 1]} : vector<1x4x16xf32> to vector<1x4x3xf32>
    %cst_22 = arith.constant dense<0xFF800000> : vector<1x4xf32>
    %52 = vector.multi_reduction <maximumf>, %51, %cst_22 [2] : vector<1x4x3xf32> to vector<1x4xf32>
    %53 = vector.shape_cast %52 : vector<1x4xf32> to vector<1x4x1xf32>
    %54 = vector.extract_strided_slice %2 {offsets = [0, 0, 13], sizes = [1, 4, 3], strides = [1, 1, 1]} : vector<1x4x16xf32> to vector<1x4x3xf32>
    %cst_23 = arith.constant dense<0.000000e+00> : vector<1x4xf32>
    %55 = vector.multi_reduction <add>, %54, %cst_23 [2] : vector<1x4x3xf32> to vector<1x4xf32>
    %56 = vector.shape_cast %55 : vector<1x4xf32> to vector<1x4x1xf32>
    %cst_24 = arith.constant 0.0833333358 : f32
    %57 = vector.broadcast %cst_24 : f32 to vector<1x4x1xf32>
    %58 = arith.mulf %56, %57 : vector<1x4x1xf32>
    %59 = tpu.concatenate %5, %13, %21, %29, %37, %45, %53 in 2 : vector<1x4x1xf32>, vector<1x4x1xf32>, vector<1x4x1xf32>, vector<1x4x1xf32>, vector<1x4x1xf32>, vector<1x4x1xf32>, vector<1x4x1xf32> -> vector<1x4x7xf32>
    %60 = vector.shape_cast %59 : vector<1x4x7xf32> to vector<1x4x1x7xf32>
    %61 = tpu.concatenate %10, %18, %26, %34, %42, %50, %58 in 2 : vector<1x4x1xf32>, vector<1x4x1xf32>, vector<1x4x1xf32>, vector<1x4x1xf32>, vector<1x4x1xf32>, vector<1x4x1xf32>, vector<1x4x1xf32> -> vector<1x4x7xf32>
    %62 = vector.shape_cast %61 : vector<1x4x7xf32> to vector<1x4x1x7xf32>
    %c0_25 = arith.constant 0 : index
    %c0_26 = arith.constant 0 : index
    %c3 = arith.constant 3 : index
    %c0_27 = arith.constant 0 : index
    %63 = vector.load %arg2[%c0_25, %c0_26, %c3, %c0_27] : memref<1x4x16x16xf32, #tpu.memory_space<vmem>>, vector<1x4x4x16xf32>
    %cst_28 = arith.constant dense<0xFF800000> : vector<1x4x16xf32>
    %64 = vector.multi_reduction <maximumf>, %63, %cst_28 [2] : vector<1x4x4x16xf32> to vector<1x4x16xf32>
    %cst_29 = arith.constant dense<0.000000e+00> : vector<1x4x16xf32>
    %65 = vector.multi_reduction <add>, %63, %cst_29 [2] : vector<1x4x4x16xf32> to vector<1x4x16xf32>
    %66 = vector.extract_strided_slice %64 {offsets = [0, 0, 0], sizes = [1, 4, 3], strides = [1, 1, 1]} : vector<1x4x16xf32> to vector<1x4x3xf32>
    %cst_30 = arith.constant dense<0xFF800000> : vector<1x4xf32>
    %67 = vector.multi_reduction <maximumf>, %66, %cst_30 [2] : vector<1x4x3xf32> to vector<1x4xf32>
    %68 = vector.shape_cast %67 : vector<1x4xf32> to vector<1x4x1xf32>
    %69 = vector.extract_strided_slice %65 {offsets = [0, 0, 0], sizes = [1, 4, 3], strides = [1, 1, 1]} : vector<1x4x16xf32> to vector<1x4x3xf32>
    %cst_31 = arith.constant dense<0.000000e+00> : vector<1x4xf32>
    %70 = vector.multi_reduction <add>, %69, %cst_31 [2] : vector<1x4x3xf32> to vector<1x4xf32>
    %71 = vector.shape_cast %70 : vector<1x4xf32> to vector<1x4x1xf32>
    %cst_32 = arith.constant 0.0833333358 : f32
    %72 = vector.broadcast %cst_32 : f32 to vector<1x4x1xf32>
    %73 = arith.mulf %71, %72 : vector<1x4x1xf32>
    %74 = vector.extract_strided_slice %64 {offsets = [0, 0, 2], sizes = [1, 4, 3], strides = [1, 1, 1]} : vector<1x4x16xf32> to vector<1x4x3xf32>
    %cst_33 = arith.constant dense<0xFF800000> : vector<1x4xf32>
    %75 = vector.multi_reduction <maximumf>, %74, %cst_33 [2] : vector<1x4x3xf32> to vector<1x4xf32>
    %76 = vector.shape_cast %75 : vector<1x4xf32> to vector<1x4x1xf32>
    %77 = vector.extract_strided_slice %65 {offsets = [0, 0, 2], sizes = [1, 4, 3], strides = [1, 1, 1]} : vector<1x4x16xf32> to vector<1x4x3xf32>
    %cst_34 = arith.constant dense<0.000000e+00> : vector<1x4xf32>
    %78 = vector.multi_reduction <add>, %77, %cst_34 [2] : vector<1x4x3xf32> to vector<1x4xf32>
    %79 = vector.shape_cast %78 : vector<1x4xf32> to vector<1x4x1xf32>
    %cst_35 = arith.constant 0.0833333358 : f32
    %80 = vector.broadcast %cst_35 : f32 to vector<1x4x1xf32>
    %81 = arith.mulf %79, %80 : vector<1x4x1xf32>
    %82 = vector.extract_strided_slice %64 {offsets = [0, 0, 4], sizes = [1, 4, 3], strides = [1, 1, 1]} : vector<1x4x16xf32> to vector<1x4x3xf32>
    %cst_36 = arith.constant dense<0xFF800000> : vector<1x4xf32>
    %83 = vector.multi_reduction <maximumf>, %82, %cst_36 [2] : vector<1x4x3xf32> to vector<1x4xf32>
    %84 = vector.shape_cast %83 : vector<1x4xf32> to vector<1x4x1xf32>
    %85 = vector.extract_strided_slice %65 {offsets = [0, 0, 4], sizes = [1, 4, 3], strides = [1, 1, 1]} : vector<1x4x16xf32> to vector<1x4x3xf32>
    %cst_37 = arith.constant dense<0.000000e+00> : vector<1x4xf32>
    %86 = vector.multi_reduction <add>, %85, %cst_37 [2] : vector<1x4x3xf32> to vector<1x4xf32>
    %87 = vector.shape_cast %86 : vector<1x4xf32> to vector<1x4x1xf32>
    %cst_38 = arith.constant 0.0833333358 : f32
    %88 = vector.broadcast %cst_38 : f32 to vector<1x4x1xf32>
    %89 = arith.mulf %87, %88 : vector<1x4x1xf32>
    %90 = vector.extract_strided_slice %64 {offsets = [0, 0, 6], sizes = [1, 4, 4], strides = [1, 1, 1]} : vector<1x4x16xf32> to vector<1x4x4xf32>
    %cst_39 = arith.constant dense<0xFF800000> : vector<1x4xf32>
    %91 = vector.multi_reduction <maximumf>, %90, %cst_39 [2] : vector<1x4x4xf32> to vector<1x4xf32>
    %92 = vector.shape_cast %91 : vector<1x4xf32> to vector<1x4x1xf32>
    %93 = vector.extract_strided_slice %65 {offsets = [0, 0, 6], sizes = [1, 4, 4], strides = [1, 1, 1]} : vector<1x4x16xf32> to vector<1x4x4xf32>
    %cst_40 = arith.constant dense<0.000000e+00> : vector<1x4xf32>
    %94 = vector.multi_reduction <add>, %93, %cst_40 [2] : vector<1x4x4xf32> to vector<1x4xf32>
    %95 = vector.shape_cast %94 : vector<1x4xf32> to vector<1x4x1xf32>
    %cst_41 = arith.constant 6.250000e-02 : f32
    %96 = vector.broadcast %cst_41 : f32 to vector<1x4x1xf32>
    %97 = arith.mulf %95, %96 : vector<1x4x1xf32>
    %98 = vector.extract_strided_slice %64 {offsets = [0, 0, 9], sizes = [1, 4, 3], strides = [1, 1, 1]} : vector<1x4x16xf32> to vector<1x4x3xf32>
    %cst_42 = arith.constant dense<0xFF800000> : vector<1x4xf32>
    %99 = vector.multi_reduction <maximumf>, %98, %cst_42 [2] : vector<1x4x3xf32> to vector<1x4xf32>
    %100 = vector.shape_cast %99 : vector<1x4xf32> to vector<1x4x1xf32>
    %101 = vector.extract_strided_slice %65 {offsets = [0, 0, 9], sizes = [1, 4, 3], strides = [1, 1, 1]} : vector<1x4x16xf32> to vector<1x4x3xf32>
    %cst_43 = arith.constant dense<0.000000e+00> : vector<1x4xf32>
    %102 = vector.multi_reduction <add>, %101, %cst_43 [2] : vector<1x4x3xf32> to vector<1x4xf32>
    %103 = vector.shape_cast %102 : vector<1x4xf32> to vector<1x4x1xf32>
    %cst_44 = arith.constant 0.0833333358 : f32
    %104 = vector.broadcast %cst_44 : f32 to vector<1x4x1xf32>
    %105 = arith.mulf %103, %104 : vector<1x4x1xf32>
    %106 = vector.extract_strided_slice %64 {offsets = [0, 0, 11], sizes = [1, 4, 3], strides = [1, 1, 1]} : vector<1x4x16xf32> to vector<1x4x3xf32>
    %cst_45 = arith.constant dense<0xFF800000> : vector<1x4xf32>
    %107 = vector.multi_reduction <maximumf>, %106, %cst_45 [2] : vector<1x4x3xf32> to vector<1x4xf32>
    %108 = vector.shape_cast %107 : vector<1x4xf32> to vector<1x4x1xf32>
    %109 = vector.extract_strided_slice %65 {offsets = [0, 0, 11], sizes = [1, 4, 3], strides = [1, 1, 1]} : vector<1x4x16xf32> to vector<1x4x3xf32>
    %cst_46 = arith.constant dense<0.000000e+00> : vector<1x4xf32>
    %110 = vector.multi_reduction <add>, %109, %cst_46 [2] : vector<1x4x3xf32> to vector<1x4xf32>
    %111 = vector.shape_cast %110 : vector<1x4xf32> to vector<1x4x1xf32>
    %cst_47 = arith.constant 0.0833333358 : f32
    %112 = vector.broadcast %cst_47 : f32 to vector<1x4x1xf32>
    %113 = arith.mulf %111, %112 : vector<1x4x1xf32>
    %114 = vector.extract_strided_slice %64 {offsets = [0, 0, 13], sizes = [1, 4, 3], strides = [1, 1, 1]} : vector<1x4x16xf32> to vector<1x4x3xf32>
    %cst_48 = arith.constant dense<0xFF800000> : vector<1x4xf32>
    %115 = vector.multi_reduction <maximumf>, %114, %cst_48 [2] : vector<1x4x3xf32> to vector<1x4xf32>
    %116 = vector.shape_cast %115 : vector<1x4xf32> to vector<1x4x1xf32>
    %117 = vector.extract_strided_slice %65 {offsets = [0, 0, 13], sizes = [1, 4, 3], strides = [1, 1, 1]} : vector<1x4x16xf32> to vector<1x4x3xf32>
    %cst_49 = arith.constant dense<0.000000e+00> : vector<1x4xf32>
    %118 = vector.multi_reduction <add>, %117, %cst_49 [2] : vector<1x4x3xf32> to vector<1x4xf32>
    %119 = vector.shape_cast %118 : vector<1x4xf32> to vector<1x4x1xf32>
    %cst_50 = arith.constant 0.0833333358 : f32
    %120 = vector.broadcast %cst_50 : f32 to vector<1x4x1xf32>
    %121 = arith.mulf %119, %120 : vector<1x4x1xf32>
    %122 = tpu.concatenate %68, %76, %84, %92, %100, %108, %116 in 2 : vector<1x4x1xf32>, vector<1x4x1xf32>, vector<1x4x1xf32>, vector<1x4x1xf32>, vector<1x4x1xf32>, vector<1x4x1xf32>, vector<1x4x1xf32> -> vector<1x4x7xf32>
    %123 = vector.shape_cast %122 : vector<1x4x7xf32> to vector<1x4x1x7xf32>
    %124 = tpu.concatenate %73, %81, %89, %97, %105, %113, %121 in 2 : vector<1x4x1xf32>, vector<1x4x1xf32>, vector<1x4x1xf32>, vector<1x4x1xf32>, vector<1x4x1xf32>, vector<1x4x1xf32>, vector<1x4x1xf32> -> vector<1x4x7xf32>
    %125 = vector.shape_cast %124 : vector<1x4x7xf32> to vector<1x4x1x7xf32>
    %c0_51 = arith.constant 0 : index
    %c0_52 = arith.constant 0 : index
    %c6 = arith.constant 6 : index
    %c0_53 = arith.constant 0 : index
    %126 = vector.load %arg2[%c0_51, %c0_52, %c6, %c0_53] : memref<1x4x16x16xf32, #tpu.memory_space<vmem>>, vector<1x4x4x16xf32>
    %cst_54 = arith.constant dense<0xFF800000> : vector<1x4x16xf32>
    %127 = vector.multi_reduction <maximumf>, %126, %cst_54 [2] : vector<1x4x4x16xf32> to vector<1x4x16xf32>
    %cst_55 = arith.constant dense<0.000000e+00> : vector<1x4x16xf32>
    %128 = vector.multi_reduction <add>, %126, %cst_55 [2] : vector<1x4x4x16xf32> to vector<1x4x16xf32>
    %129 = vector.extract_strided_slice %127 {offsets = [0, 0, 0], sizes = [1, 4, 3], strides = [1, 1, 1]} : vector<1x4x16xf32> to vector<1x4x3xf32>
    %cst_56 = arith.constant dense<0xFF800000> : vector<1x4xf32>
    %130 = vector.multi_reduction <maximumf>, %129, %cst_56 [2] : vector<1x4x3xf32> to vector<1x4xf32>
    %131 = vector.shape_cast %130 : vector<1x4xf32> to vector<1x4x1xf32>
    %132 = vector.extract_strided_slice %128 {offsets = [0, 0, 0], sizes = [1, 4, 3], strides = [1, 1, 1]} : vector<1x4x16xf32> to vector<1x4x3xf32>
    %cst_57 = arith.constant dense<0.000000e+00> : vector<1x4xf32>
    %133 = vector.multi_reduction <add>, %132, %cst_57 [2] : vector<1x4x3xf32> to vector<1x4xf32>
    %134 = vector.shape_cast %133 : vector<1x4xf32> to vector<1x4x1xf32>
    %cst_58 = arith.constant 0.0833333358 : f32
    %135 = vector.broadcast %cst_58 : f32 to vector<1x4x1xf32>
    %136 = arith.mulf %134, %135 : vector<1x4x1xf32>
    %137 = vector.extract_strided_slice %127 {offsets = [0, 0, 2], sizes = [1, 4, 3], strides = [1, 1, 1]} : vector<1x4x16xf32> to vector<1x4x3xf32>
    %cst_59 = arith.constant dense<0xFF800000> : vector<1x4xf32>
    %138 = vector.multi_reduction <maximumf>, %137, %cst_59 [2] : vector<1x4x3xf32> to vector<1x4xf32>
    %139 = vector.shape_cast %138 : vector<1x4xf32> to vector<1x4x1xf32>
    %140 = vector.extract_strided_slice %128 {offsets = [0, 0, 2], sizes = [1, 4, 3], strides = [1, 1, 1]} : vector<1x4x16xf32> to vector<1x4x3xf32>
    %cst_60 = arith.constant dense<0.000000e+00> : vector<1x4xf32>
    %141 = vector.multi_reduction <add>, %140, %cst_60 [2] : vector<1x4x3xf32> to vector<1x4xf32>
    %142 = vector.shape_cast %141 : vector<1x4xf32> to vector<1x4x1xf32>
    %cst_61 = arith.constant 0.0833333358 : f32
    %143 = vector.broadcast %cst_61 : f32 to vector<1x4x1xf32>
    %144 = arith.mulf %142, %143 : vector<1x4x1xf32>
    %145 = vector.extract_strided_slice %127 {offsets = [0, 0, 4], sizes = [1, 4, 3], strides = [1, 1, 1]} : vector<1x4x16xf32> to vector<1x4x3xf32>
    %cst_62 = arith.constant dense<0xFF800000> : vector<1x4xf32>
    %146 = vector.multi_reduction <maximumf>, %145, %cst_62 [2] : vector<1x4x3xf32> to vector<1x4xf32>
    %147 = vector.shape_cast %146 : vector<1x4xf32> to vector<1x4x1xf32>
    %148 = vector.extract_strided_slice %128 {offsets = [0, 0, 4], sizes = [1, 4, 3], strides = [1, 1, 1]} : vector<1x4x16xf32> to vector<1x4x3xf32>
    %cst_63 = arith.constant dense<0.000000e+00> : vector<1x4xf32>
    %149 = vector.multi_reduction <add>, %148, %cst_63 [2] : vector<1x4x3xf32> to vector<1x4xf32>
    %150 = vector.shape_cast %149 : vector<1x4xf32> to vector<1x4x1xf32>
    %cst_64 = arith.constant 0.0833333358 : f32
    %151 = vector.broadcast %cst_64 : f32 to vector<1x4x1xf32>
    %152 = arith.mulf %150, %151 : vector<1x4x1xf32>
    %153 = vector.extract_strided_slice %127 {offsets = [0, 0, 6], sizes = [1, 4, 4], strides = [1, 1, 1]} : vector<1x4x16xf32> to vector<1x4x4xf32>
    %cst_65 = arith.constant dense<0xFF800000> : vector<1x4xf32>
    %154 = vector.multi_reduction <maximumf>, %153, %cst_65 [2] : vector<1x4x4xf32> to vector<1x4xf32>
    %155 = vector.shape_cast %154 : vector<1x4xf32> to vector<1x4x1xf32>
    %156 = vector.extract_strided_slice %128 {offsets = [0, 0, 6], sizes = [1, 4, 4], strides = [1, 1, 1]} : vector<1x4x16xf32> to vector<1x4x4xf32>
    %cst_66 = arith.constant dense<0.000000e+00> : vector<1x4xf32>
    %157 = vector.multi_reduction <add>, %156, %cst_66 [2] : vector<1x4x4xf32> to vector<1x4xf32>
    %158 = vector.shape_cast %157 : vector<1x4xf32> to vector<1x4x1xf32>
    %cst_67 = arith.constant 6.250000e-02 : f32
    %159 = vector.broadcast %cst_67 : f32 to vector<1x4x1xf32>
    %160 = arith.mulf %158, %159 : vector<1x4x1xf32>
    %161 = vector.extract_strided_slice %127 {offsets = [0, 0, 9], sizes = [1, 4, 3], strides = [1, 1, 1]} : vector<1x4x16xf32> to vector<1x4x3xf32>
    %cst_68 = arith.constant dense<0xFF800000> : vector<1x4xf32>
    %162 = vector.multi_reduction <maximumf>, %161, %cst_68 [2] : vector<1x4x3xf32> to vector<1x4xf32>
    %163 = vector.shape_cast %162 : vector<1x4xf32> to vector<1x4x1xf32>
    %164 = vector.extract_strided_slice %128 {offsets = [0, 0, 9], sizes = [1, 4, 3], strides = [1, 1, 1]} : vector<1x4x16xf32> to vector<1x4x3xf32>
    %cst_69 = arith.constant dense<0.000000e+00> : vector<1x4xf32>
    %165 = vector.multi_reduction <add>, %164, %cst_69 [2] : vector<1x4x3xf32> to vector<1x4xf32>
    %166 = vector.shape_cast %165 : vector<1x4xf32> to vector<1x4x1xf32>
    %cst_70 = arith.constant 0.0833333358 : f32
    %167 = vector.broadcast %cst_70 : f32 to vector<1x4x1xf32>
    %168 = arith.mulf %166, %167 : vector<1x4x1xf32>
    %169 = vector.extract_strided_slice %127 {offsets = [0, 0, 11], sizes = [1, 4, 3], strides = [1, 1, 1]} : vector<1x4x16xf32> to vector<1x4x3xf32>
    %cst_71 = arith.constant dense<0xFF800000> : vector<1x4xf32>
    %170 = vector.multi_reduction <maximumf>, %169, %cst_71 [2] : vector<1x4x3xf32> to vector<1x4xf32>
    %171 = vector.shape_cast %170 : vector<1x4xf32> to vector<1x4x1xf32>
    %172 = vector.extract_strided_slice %128 {offsets = [0, 0, 11], sizes = [1, 4, 3], strides = [1, 1, 1]} : vector<1x4x16xf32> to vector<1x4x3xf32>
    %cst_72 = arith.constant dense<0.000000e+00> : vector<1x4xf32>
    %173 = vector.multi_reduction <add>, %172, %cst_72 [2] : vector<1x4x3xf32> to vector<1x4xf32>
    %174 = vector.shape_cast %173 : vector<1x4xf32> to vector<1x4x1xf32>
    %cst_73 = arith.constant 0.0833333358 : f32
    %175 = vector.broadcast %cst_73 : f32 to vector<1x4x1xf32>
    %176 = arith.mulf %174, %175 : vector<1x4x1xf32>
    %177 = vector.extract_strided_slice %127 {offsets = [0, 0, 13], sizes = [1, 4, 3], strides = [1, 1, 1]} : vector<1x4x16xf32> to vector<1x4x3xf32>
    %cst_74 = arith.constant dense<0xFF800000> : vector<1x4xf32>
    %178 = vector.multi_reduction <maximumf>, %177, %cst_74 [2] : vector<1x4x3xf32> to vector<1x4xf32>
    %179 = vector.shape_cast %178 : vector<1x4xf32> to vector<1x4x1xf32>
    %180 = vector.extract_strided_slice %128 {offsets = [0, 0, 13], sizes = [1, 4, 3], strides = [1, 1, 1]} : vector<1x4x16xf32> to vector<1x4x3xf32>
    %cst_75 = arith.constant dense<0.000000e+00> : vector<1x4xf32>
    %181 = vector.multi_reduction <add>, %180, %cst_75 [2] : vector<1x4x3xf32> to vector<1x4xf32>
    %182 = vector.shape_cast %181 : vector<1x4xf32> to vector<1x4x1xf32>
    %cst_76 = arith.constant 0.0833333358 : f32
    %183 = vector.broadcast %cst_76 : f32 to vector<1x4x1xf32>
    %184 = arith.mulf %182, %183 : vector<1x4x1xf32>
    %185 = tpu.concatenate %131, %139, %147, %155, %163, %171, %179 in 2 : vector<1x4x1xf32>, vector<1x4x1xf32>, vector<1x4x1xf32>, vector<1x4x1xf32>, vector<1x4x1xf32>, vector<1x4x1xf32>, vector<1x4x1xf32> -> vector<1x4x7xf32>
    %186 = vector.shape_cast %185 : vector<1x4x7xf32> to vector<1x4x1x7xf32>
    %187 = tpu.concatenate %136, %144, %152, %160, %168, %176, %184 in 2 : vector<1x4x1xf32>, vector<1x4x1xf32>, vector<1x4x1xf32>, vector<1x4x1xf32>, vector<1x4x1xf32>, vector<1x4x1xf32>, vector<1x4x1xf32> -> vector<1x4x7xf32>
    %188 = vector.shape_cast %187 : vector<1x4x7xf32> to vector<1x4x1x7xf32>
    %c0_77 = arith.constant 0 : index
    %c0_78 = arith.constant 0 : index
    %c9 = arith.constant 9 : index
    %c0_79 = arith.constant 0 : index
    %189 = vector.load %arg2[%c0_77, %c0_78, %c9, %c0_79] : memref<1x4x16x16xf32, #tpu.memory_space<vmem>>, vector<1x4x4x16xf32>
    %cst_80 = arith.constant dense<0xFF800000> : vector<1x4x16xf32>
    %190 = vector.multi_reduction <maximumf>, %189, %cst_80 [2] : vector<1x4x4x16xf32> to vector<1x4x16xf32>
    %cst_81 = arith.constant dense<0.000000e+00> : vector<1x4x16xf32>
    %191 = vector.multi_reduction <add>, %189, %cst_81 [2] : vector<1x4x4x16xf32> to vector<1x4x16xf32>
    %192 = vector.extract_strided_slice %190 {offsets = [0, 0, 0], sizes = [1, 4, 3], strides = [1, 1, 1]} : vector<1x4x16xf32> to vector<1x4x3xf32>
    %cst_82 = arith.constant dense<0xFF800000> : vector<1x4xf32>
    %193 = vector.multi_reduction <maximumf>, %192, %cst_82 [2] : vector<1x4x3xf32> to vector<1x4xf32>
    %194 = vector.shape_cast %193 : vector<1x4xf32> to vector<1x4x1xf32>
    %195 = vector.extract_strided_slice %191 {offsets = [0, 0, 0], sizes = [1, 4, 3], strides = [1, 1, 1]} : vector<1x4x16xf32> to vector<1x4x3xf32>
    %cst_83 = arith.constant dense<0.000000e+00> : vector<1x4xf32>
    %196 = vector.multi_reduction <add>, %195, %cst_83 [2] : vector<1x4x3xf32> to vector<1x4xf32>
    %197 = vector.shape_cast %196 : vector<1x4xf32> to vector<1x4x1xf32>
    %cst_84 = arith.constant 0.0833333358 : f32
    %198 = vector.broadcast %cst_84 : f32 to vector<1x4x1xf32>
    %199 = arith.mulf %197, %198 : vector<1x4x1xf32>
    %200 = vector.extract_strided_slice %190 {offsets = [0, 0, 2], sizes = [1, 4, 3], strides = [1, 1, 1]} : vector<1x4x16xf32> to vector<1x4x3xf32>
    %cst_85 = arith.constant dense<0xFF800000> : vector<1x4xf32>
    %201 = vector.multi_reduction <maximumf>, %200, %cst_85 [2] : vector<1x4x3xf32> to vector<1x4xf32>
    %202 = vector.shape_cast %201 : vector<1x4xf32> to vector<1x4x1xf32>
    %203 = vector.extract_strided_slice %191 {offsets = [0, 0, 2], sizes = [1, 4, 3], strides = [1, 1, 1]} : vector<1x4x16xf32> to vector<1x4x3xf32>
    %cst_86 = arith.constant dense<0.000000e+00> : vector<1x4xf32>
    %204 = vector.multi_reduction <add>, %203, %cst_86 [2] : vector<1x4x3xf32> to vector<1x4xf32>
    %205 = vector.shape_cast %204 : vector<1x4xf32> to vector<1x4x1xf32>
    %cst_87 = arith.constant 0.0833333358 : f32
    %206 = vector.broadcast %cst_87 : f32 to vector<1x4x1xf32>
    %207 = arith.mulf %205, %206 : vector<1x4x1xf32>
    %208 = vector.extract_strided_slice %190 {offsets = [0, 0, 4], sizes = [1, 4, 3], strides = [1, 1, 1]} : vector<1x4x16xf32> to vector<1x4x3xf32>
    %cst_88 = arith.constant dense<0xFF800000> : vector<1x4xf32>
    %209 = vector.multi_reduction <maximumf>, %208, %cst_88 [2] : vector<1x4x3xf32> to vector<1x4xf32>
    %210 = vector.shape_cast %209 : vector<1x4xf32> to vector<1x4x1xf32>
    %211 = vector.extract_strided_slice %191 {offsets = [0, 0, 4], sizes = [1, 4, 3], strides = [1, 1, 1]} : vector<1x4x16xf32> to vector<1x4x3xf32>
    %cst_89 = arith.constant dense<0.000000e+00> : vector<1x4xf32>
    %212 = vector.multi_reduction <add>, %211, %cst_89 [2] : vector<1x4x3xf32> to vector<1x4xf32>
    %213 = vector.shape_cast %212 : vector<1x4xf32> to vector<1x4x1xf32>
    %cst_90 = arith.constant 0.0833333358 : f32
    %214 = vector.broadcast %cst_90 : f32 to vector<1x4x1xf32>
    %215 = arith.mulf %213, %214 : vector<1x4x1xf32>
    %216 = vector.extract_strided_slice %190 {offsets = [0, 0, 6], sizes = [1, 4, 4], strides = [1, 1, 1]} : vector<1x4x16xf32> to vector<1x4x4xf32>
    %cst_91 = arith.constant dense<0xFF800000> : vector<1x4xf32>
    %217 = vector.multi_reduction <maximumf>, %216, %cst_91 [2] : vector<1x4x4xf32> to vector<1x4xf32>
    %218 = vector.shape_cast %217 : vector<1x4xf32> to vector<1x4x1xf32>
    %219 = vector.extract_strided_slice %191 {offsets = [0, 0, 6], sizes = [1, 4, 4], strides = [1, 1, 1]} : vector<1x4x16xf32> to vector<1x4x4xf32>
    %cst_92 = arith.constant dense<0.000000e+00> : vector<1x4xf32>
    %220 = vector.multi_reduction <add>, %219, %cst_92 [2] : vector<1x4x4xf32> to vector<1x4xf32>
    %221 = vector.shape_cast %220 : vector<1x4xf32> to vector<1x4x1xf32>
    %cst_93 = arith.constant 6.250000e-02 : f32
    %222 = vector.broadcast %cst_93 : f32 to vector<1x4x1xf32>
    %223 = arith.mulf %221, %222 : vector<1x4x1xf32>
    %224 = vector.extract_strided_slice %190 {offsets = [0, 0, 9], sizes = [1, 4, 3], strides = [1, 1, 1]} : vector<1x4x16xf32> to vector<1x4x3xf32>
    %cst_94 = arith.constant dense<0xFF800000> : vector<1x4xf32>
    %225 = vector.multi_reduction <maximumf>, %224, %cst_94 [2] : vector<1x4x3xf32> to vector<1x4xf32>
    %226 = vector.shape_cast %225 : vector<1x4xf32> to vector<1x4x1xf32>
    %227 = vector.extract_strided_slice %191 {offsets = [0, 0, 9], sizes = [1, 4, 3], strides = [1, 1, 1]} : vector<1x4x16xf32> to vector<1x4x3xf32>
    %cst_95 = arith.constant dense<0.000000e+00> : vector<1x4xf32>
    %228 = vector.multi_reduction <add>, %227, %cst_95 [2] : vector<1x4x3xf32> to vector<1x4xf32>
    %229 = vector.shape_cast %228 : vector<1x4xf32> to vector<1x4x1xf32>
    %cst_96 = arith.constant 0.0833333358 : f32
    %230 = vector.broadcast %cst_96 : f32 to vector<1x4x1xf32>
    %231 = arith.mulf %229, %230 : vector<1x4x1xf32>
    %232 = vector.extract_strided_slice %190 {offsets = [0, 0, 11], sizes = [1, 4, 3], strides = [1, 1, 1]} : vector<1x4x16xf32> to vector<1x4x3xf32>
    %cst_97 = arith.constant dense<0xFF800000> : vector<1x4xf32>
    %233 = vector.multi_reduction <maximumf>, %232, %cst_97 [2] : vector<1x4x3xf32> to vector<1x4xf32>
    %234 = vector.shape_cast %233 : vector<1x4xf32> to vector<1x4x1xf32>
    %235 = vector.extract_strided_slice %191 {offsets = [0, 0, 11], sizes = [1, 4, 3], strides = [1, 1, 1]} : vector<1x4x16xf32> to vector<1x4x3xf32>
    %cst_98 = arith.constant dense<0.000000e+00> : vector<1x4xf32>
    %236 = vector.multi_reduction <add>, %235, %cst_98 [2] : vector<1x4x3xf32> to vector<1x4xf32>
    %237 = vector.shape_cast %236 : vector<1x4xf32> to vector<1x4x1xf32>
    %cst_99 = arith.constant 0.0833333358 : f32
    %238 = vector.broadcast %cst_99 : f32 to vector<1x4x1xf32>
    %239 = arith.mulf %237, %238 : vector<1x4x1xf32>
    %240 = vector.extract_strided_slice %190 {offsets = [0, 0, 13], sizes = [1, 4, 3], strides = [1, 1, 1]} : vector<1x4x16xf32> to vector<1x4x3xf32>
    %cst_100 = arith.constant dense<0xFF800000> : vector<1x4xf32>
    %241 = vector.multi_reduction <maximumf>, %240, %cst_100 [2] : vector<1x4x3xf32> to vector<1x4xf32>
    %242 = vector.shape_cast %241 : vector<1x4xf32> to vector<1x4x1xf32>
    %243 = vector.extract_strided_slice %191 {offsets = [0, 0, 13], sizes = [1, 4, 3], strides = [1, 1, 1]} : vector<1x4x16xf32> to vector<1x4x3xf32>
    %cst_101 = arith.constant dense<0.000000e+00> : vector<1x4xf32>
    %244 = vector.multi_reduction <add>, %243, %cst_101 [2] : vector<1x4x3xf32> to vector<1x4xf32>
    %245 = vector.shape_cast %244 : vector<1x4xf32> to vector<1x4x1xf32>
    %cst_102 = arith.constant 0.0833333358 : f32
    %246 = vector.broadcast %cst_102 : f32 to vector<1x4x1xf32>
    %247 = arith.mulf %245, %246 : vector<1x4x1xf32>
    %248 = tpu.concatenate %194, %202, %210, %218, %226, %234, %242 in 2 : vector<1x4x1xf32>, vector<1x4x1xf32>, vector<1x4x1xf32>, vector<1x4x1xf32>, vector<1x4x1xf32>, vector<1x4x1xf32>, vector<1x4x1xf32> -> vector<1x4x7xf32>
    %249 = vector.shape_cast %248 : vector<1x4x7xf32> to vector<1x4x1x7xf32>
    %250 = tpu.concatenate %199, %207, %215, %223, %231, %239, %247 in 2 : vector<1x4x1xf32>, vector<1x4x1xf32>, vector<1x4x1xf32>, vector<1x4x1xf32>, vector<1x4x1xf32>, vector<1x4x1xf32>, vector<1x4x1xf32> -> vector<1x4x7xf32>
    %251 = vector.shape_cast %250 : vector<1x4x7xf32> to vector<1x4x1x7xf32>
    %c0_103 = arith.constant 0 : index
    %c0_104 = arith.constant 0 : index
    %c12 = arith.constant 12 : index
    %c0_105 = arith.constant 0 : index
    %252 = vector.load %arg2[%c0_103, %c0_104, %c12, %c0_105] : memref<1x4x16x16xf32, #tpu.memory_space<vmem>>, vector<1x4x4x16xf32>
    %cst_106 = arith.constant dense<0xFF800000> : vector<1x4x16xf32>
    %253 = vector.multi_reduction <maximumf>, %252, %cst_106 [2] : vector<1x4x4x16xf32> to vector<1x4x16xf32>
    %cst_107 = arith.constant dense<0.000000e+00> : vector<1x4x16xf32>
    %254 = vector.multi_reduction <add>, %252, %cst_107 [2] : vector<1x4x4x16xf32> to vector<1x4x16xf32>
    %255 = vector.extract_strided_slice %253 {offsets = [0, 0, 0], sizes = [1, 4, 3], strides = [1, 1, 1]} : vector<1x4x16xf32> to vector<1x4x3xf32>
    %cst_108 = arith.constant dense<0xFF800000> : vector<1x4xf32>
    %256 = vector.multi_reduction <maximumf>, %255, %cst_108 [2] : vector<1x4x3xf32> to vector<1x4xf32>
    %257 = vector.shape_cast %256 : vector<1x4xf32> to vector<1x4x1xf32>
    %258 = vector.extract_strided_slice %254 {offsets = [0, 0, 0], sizes = [1, 4, 3], strides = [1, 1, 1]} : vector<1x4x16xf32> to vector<1x4x3xf32>
    %cst_109 = arith.constant dense<0.000000e+00> : vector<1x4xf32>
    %259 = vector.multi_reduction <add>, %258, %cst_109 [2] : vector<1x4x3xf32> to vector<1x4xf32>
    %260 = vector.shape_cast %259 : vector<1x4xf32> to vector<1x4x1xf32>
    %cst_110 = arith.constant 0.0833333358 : f32
    %261 = vector.broadcast %cst_110 : f32 to vector<1x4x1xf32>
    %262 = arith.mulf %260, %261 : vector<1x4x1xf32>
    %263 = vector.extract_strided_slice %253 {offsets = [0, 0, 2], sizes = [1, 4, 3], strides = [1, 1, 1]} : vector<1x4x16xf32> to vector<1x4x3xf32>
    %cst_111 = arith.constant dense<0xFF800000> : vector<1x4xf32>
    %264 = vector.multi_reduction <maximumf>, %263, %cst_111 [2] : vector<1x4x3xf32> to vector<1x4xf32>
    %265 = vector.shape_cast %264 : vector<1x4xf32> to vector<1x4x1xf32>
    %266 = vector.extract_strided_slice %254 {offsets = [0, 0, 2], sizes = [1, 4, 3], strides = [1, 1, 1]} : vector<1x4x16xf32> to vector<1x4x3xf32>
    %cst_112 = arith.constant dense<0.000000e+00> : vector<1x4xf32>
    %267 = vector.multi_reduction <add>, %266, %cst_112 [2] : vector<1x4x3xf32> to vector<1x4xf32>
    %268 = vector.shape_cast %267 : vector<1x4xf32> to vector<1x4x1xf32>
    %cst_113 = arith.constant 0.0833333358 : f32
    %269 = vector.broadcast %cst_113 : f32 to vector<1x4x1xf32>
    %270 = arith.mulf %268, %269 : vector<1x4x1xf32>
    %271 = vector.extract_strided_slice %253 {offsets = [0, 0, 4], sizes = [1, 4, 3], strides = [1, 1, 1]} : vector<1x4x16xf32> to vector<1x4x3xf32>
    %cst_114 = arith.constant dense<0xFF800000> : vector<1x4xf32>
    %272 = vector.multi_reduction <maximumf>, %271, %cst_114 [2] : vector<1x4x3xf32> to vector<1x4xf32>
    %273 = vector.shape_cast %272 : vector<1x4xf32> to vector<1x4x1xf32>
    %274 = vector.extract_strided_slice %254 {offsets = [0, 0, 4], sizes = [1, 4, 3], strides = [1, 1, 1]} : vector<1x4x16xf32> to vector<1x4x3xf32>
    %cst_115 = arith.constant dense<0.000000e+00> : vector<1x4xf32>
    %275 = vector.multi_reduction <add>, %274, %cst_115 [2] : vector<1x4x3xf32> to vector<1x4xf32>
    %276 = vector.shape_cast %275 : vector<1x4xf32> to vector<1x4x1xf32>
    %cst_116 = arith.constant 0.0833333358 : f32
    %277 = vector.broadcast %cst_116 : f32 to vector<1x4x1xf32>
    %278 = arith.mulf %276, %277 : vector<1x4x1xf32>
    %279 = vector.extract_strided_slice %253 {offsets = [0, 0, 6], sizes = [1, 4, 4], strides = [1, 1, 1]} : vector<1x4x16xf32> to vector<1x4x4xf32>
    %cst_117 = arith.constant dense<0xFF800000> : vector<1x4xf32>
    %280 = vector.multi_reduction <maximumf>, %279, %cst_117 [2] : vector<1x4x4xf32> to vector<1x4xf32>
    %281 = vector.shape_cast %280 : vector<1x4xf32> to vector<1x4x1xf32>
    %282 = vector.extract_strided_slice %254 {offsets = [0, 0, 6], sizes = [1, 4, 4], strides = [1, 1, 1]} : vector<1x4x16xf32> to vector<1x4x4xf32>
    %cst_118 = arith.constant dense<0.000000e+00> : vector<1x4xf32>
    %283 = vector.multi_reduction <add>, %282, %cst_118 [2] : vector<1x4x4xf32> to vector<1x4xf32>
    %284 = vector.shape_cast %283 : vector<1x4xf32> to vector<1x4x1xf32>
    %cst_119 = arith.constant 6.250000e-02 : f32
    %285 = vector.broadcast %cst_119 : f32 to vector<1x4x1xf32>
    %286 = arith.mulf %284, %285 : vector<1x4x1xf32>
    %287 = vector.extract_strided_slice %253 {offsets = [0, 0, 9], sizes = [1, 4, 3], strides = [1, 1, 1]} : vector<1x4x16xf32> to vector<1x4x3xf32>
    %cst_120 = arith.constant dense<0xFF800000> : vector<1x4xf32>
    %288 = vector.multi_reduction <maximumf>, %287, %cst_120 [2] : vector<1x4x3xf32> to vector<1x4xf32>
    %289 = vector.shape_cast %288 : vector<1x4xf32> to vector<1x4x1xf32>
    %290 = vector.extract_strided_slice %254 {offsets = [0, 0, 9], sizes = [1, 4, 3], strides = [1, 1, 1]} : vector<1x4x16xf32> to vector<1x4x3xf32>
    %cst_121 = arith.constant dense<0.000000e+00> : vector<1x4xf32>
    %291 = vector.multi_reduction <add>, %290, %cst_121 [2] : vector<1x4x3xf32> to vector<1x4xf32>
    %292 = vector.shape_cast %291 : vector<1x4xf32> to vector<1x4x1xf32>
    %cst_122 = arith.constant 0.0833333358 : f32
    %293 = vector.broadcast %cst_122 : f32 to vector<1x4x1xf32>
    %294 = arith.mulf %292, %293 : vector<1x4x1xf32>
    %295 = vector.extract_strided_slice %253 {offsets = [0, 0, 11], sizes = [1, 4, 3], strides = [1, 1, 1]} : vector<1x4x16xf32> to vector<1x4x3xf32>
    %cst_123 = arith.constant dense<0xFF800000> : vector<1x4xf32>
    %296 = vector.multi_reduction <maximumf>, %295, %cst_123 [2] : vector<1x4x3xf32> to vector<1x4xf32>
    %297 = vector.shape_cast %296 : vector<1x4xf32> to vector<1x4x1xf32>
    %298 = vector.extract_strided_slice %254 {offsets = [0, 0, 11], sizes = [1, 4, 3], strides = [1, 1, 1]} : vector<1x4x16xf32> to vector<1x4x3xf32>
    %cst_124 = arith.constant dense<0.000000e+00> : vector<1x4xf32>
    %299 = vector.multi_reduction <add>, %298, %cst_124 [2] : vector<1x4x3xf32> to vector<1x4xf32>
    %300 = vector.shape_cast %299 : vector<1x4xf32> to vector<1x4x1xf32>
    %cst_125 = arith.constant 0.0833333358 : f32
    %301 = vector.broadcast %cst_125 : f32 to vector<1x4x1xf32>
    %302 = arith.mulf %300, %301 : vector<1x4x1xf32>
    %303 = vector.extract_strided_slice %253 {offsets = [0, 0, 13], sizes = [1, 4, 3], strides = [1, 1, 1]} : vector<1x4x16xf32> to vector<1x4x3xf32>
    %cst_126 = arith.constant dense<0xFF800000> : vector<1x4xf32>
    %304 = vector.multi_reduction <maximumf>, %303, %cst_126 [2] : vector<1x4x3xf32> to vector<1x4xf32>
    %305 = vector.shape_cast %304 : vector<1x4xf32> to vector<1x4x1xf32>
    %306 = vector.extract_strided_slice %254 {offsets = [0, 0, 13], sizes = [1, 4, 3], strides = [1, 1, 1]} : vector<1x4x16xf32> to vector<1x4x3xf32>
    %cst_127 = arith.constant dense<0.000000e+00> : vector<1x4xf32>
    %307 = vector.multi_reduction <add>, %306, %cst_127 [2] : vector<1x4x3xf32> to vector<1x4xf32>
    %308 = vector.shape_cast %307 : vector<1x4xf32> to vector<1x4x1xf32>
    %cst_128 = arith.constant 0.0833333358 : f32
    %309 = vector.broadcast %cst_128 : f32 to vector<1x4x1xf32>
    %310 = arith.mulf %308, %309 : vector<1x4x1xf32>
    %311 = tpu.concatenate %257, %265, %273, %281, %289, %297, %305 in 2 : vector<1x4x1xf32>, vector<1x4x1xf32>, vector<1x4x1xf32>, vector<1x4x1xf32>, vector<1x4x1xf32>, vector<1x4x1xf32>, vector<1x4x1xf32> -> vector<1x4x7xf32>
    %312 = vector.shape_cast %311 : vector<1x4x7xf32> to vector<1x4x1x7xf32>
    %313 = tpu.concatenate %262, %270, %278, %286, %294, %302, %310 in 2 : vector<1x4x1xf32>, vector<1x4x1xf32>, vector<1x4x1xf32>, vector<1x4x1xf32>, vector<1x4x1xf32>, vector<1x4x1xf32>, vector<1x4x1xf32> -> vector<1x4x7xf32>
    %314 = vector.shape_cast %313 : vector<1x4x7xf32> to vector<1x4x1x7xf32>
    %315 = tpu.concatenate %60, %123, %186, %249, %312 in 2 : vector<1x4x1x7xf32>, vector<1x4x1x7xf32>, vector<1x4x1x7xf32>, vector<1x4x1x7xf32>, vector<1x4x1x7xf32> -> vector<1x4x5x7xf32>
    %316 = tpu.concatenate %62, %125, %188, %251, %314 in 2 : vector<1x4x1x7xf32>, vector<1x4x1x7xf32>, vector<1x4x1x7xf32>, vector<1x4x1x7xf32>, vector<1x4x1x7xf32> -> vector<1x4x5x7xf32>
    %c0_129 = arith.constant 0 : index
    %c0_130 = arith.constant 0 : index
    %c0_131 = arith.constant 0 : index
    %c0_132 = arith.constant 0 : index
    %c0_133 = arith.constant 0 : index
    %317 = vector.load %arg3[%c0_129, %c0_130, %c0_131, %c0_132, %c0_133] : memref<1x2x4x5x7xf32, #tpu.memory_space<vmem>>, vector<1x1x4x5x7xf32>
    %318 = vector.shape_cast %317 : vector<1x1x4x5x7xf32> to vector<1x4x5x7xf32>
    %319 = vector.shape_cast %315 : vector<1x4x5x7xf32> to vector<1x1x4x5x7xf32>
    tpu.vector_store %arg3[%c0_129, %c0_130, %c0_131, %c0_132, %c0_133], %319 {strides = array<i32>} : memref<1x2x4x5x7xf32, #tpu.memory_space<vmem>>, vector<1x1x4x5x7xf32>,
    %c0_134 = arith.constant 0 : index
    %c1 = arith.constant 1 : index
    %c0_135 = arith.constant 0 : index
    %c0_136 = arith.constant 0 : index
    %c0_137 = arith.constant 0 : index
    %320 = vector.load %arg3[%c0_134, %c1, %c0_135, %c0_136, %c0_137] : memref<1x2x4x5x7xf32, #tpu.memory_space<vmem>>, vector<1x1x4x5x7xf32>
    %321 = vector.shape_cast %320 : vector<1x1x4x5x7xf32> to vector<1x4x5x7xf32>
    %322 = vector.shape_cast %316 : vector<1x4x5x7xf32> to vector<1x1x4x5x7xf32>
    tpu.vector_store %arg3[%c0_134, %c1, %c0_135, %c0_136, %c0_137], %322 {strides = array<i32>} : memref<1x2x4x5x7xf32, #tpu.memory_space<vmem>>, vector<1x1x4x5x7xf32>,
    return
  }
  func.func @transform_0(%arg0: i32, %arg1: i32) -> (i32, i32, i32, i32) {
    %c0_i32 = arith.constant 0 : i32
    %c0_i32_0 = arith.constant 0 : i32
    %c0_i32_1 = arith.constant 0 : i32
    return %arg0, %arg1, %c0_i32, %c0_i32_0 : i32, i32, i32, i32
  }
  func.func @transform_1(%arg0: i32, %arg1: i32) -> (i32, i32, i32, i32, i32) {
    %c0_i32 = arith.constant 0 : i32
    %c0_i32_0 = arith.constant 0 : i32
    %c0_i32_1 = arith.constant 0 : i32
    %c0_i32_2 = arith.constant 0 : i32
    return %arg0, %c0_i32, %arg1, %c0_i32_0, %c0_i32_1 : i32, i32, i32, i32, i32
  }
}

</mosaic_0001>

<llo_original>
// kernel: tpu_custom_call.1
$region0: #{tpu_custom_call.1}
  #allocation0 [shape = 'u32[]', space=smem, size = 0x4, offset = 0x4, fixed_abs, tag = 'smem constant byte address 0x4 - core index']
  #allocation1 [shape = 'u32[144,128]{1,0:T(1,128)}', space=vmem, size = 0x12000, scoped, tag = 'internal scratch']
  %s0 = inlined_call_operand.hbm [shape: f32[2,4,16,16], index: 0, kind: input, shape index: {}]
  %s1 = inlined_call_operand.vmem [shape: f32[2,2,4,5,7], index: 1, kind: output, shape index: {}]
  %s2 = sld [smem:[#allocation0]]
  $region41: #{tpu_custom_call.1} parent=0
    _
  %s4 = ssub.s32 1, %s2
  %s5 = scalar_select 0, %s4, %s2
  $region1: #{tpu_custom_call.1} parent=0
    #allocation2 [shape = 'u8[65536]{0}', space=vmem, size = 0x10000, scoped, tag = 'input window, operand 0']
    #allocation3 [shape = 's32[2]{0}', space=sflag, size = 0x8, scoped, tag = 'scoped memory for tpu_custom_call.1']
    %6 = vsyncpa [#allocation3], 0
    %s7 = scalar_lea.sflag [#allocation3], 1
    %8 = vsyncpa %s7, 0
    loop: start=0, step=1, limit=4
    $region2: #{tpu_custom_call.1} parent=1 // loop_pre_header
      _
    $region3: #{tpu_custom_call.1} parent=1 // loop_header
      %s10 = sphi 0, %s14
      %p11 = scmp.ge.s32.totalorder %s10, 4
      %s17 = sphi 0, %s29
      %s18 = sphi 0, %s25
      %s19 = sphi 0, %s17
      %s20 = sphi 0, %s18
      %s21 = sphi 0, %s19
      %s22 = sphi 0, %s20
      %s34 = sphi 0, %s36
      %s37 = sphi 0, %s34
      %s38 = sphi 0, %s37
      %s54 = sphi 0, %s38
      %s62 = sphi 0, %s64
      %s65 = sphi 0, %s62
      %s66 = sphi 0, %s65
      %s82 = sphi 0, %s66
    $region4: #{tpu_custom_call.1} parent=1 // loop_header_branch
      %13 = sbr.rel (%p11) target = $region8
    $region5: #{tpu_custom_call.1} parent=1 // loop_body
      %s15 = ssub.s32 %s10, 1
      %s16 = ssub.s32 %s10, 2
      %s23 = sadd.s32 1, %s18
      %p24 = scmp.ge.s32.totalorder %s23, 1
      %s25 = scalar_select %p24, 0, %s23
      %s26 = sadd.s32 1, %s17
      %s27 = scalar_select %p24, %s26, %s17
      %p28 = scmp.ge.s32.totalorder %s27, 2
      %s29 = scalar_select %p28, 0, %s27
      %s30 = ssub.s32 %s17, %s29
      %s31 = ssub.s32 %s18, %s25
      %s32 = sor.u32 %s30, %s31
      %p33 = scmp.eq.s32.totalorder %s32, 0
      %s35 = sadd.s32 %s34, 1
      %s36 = scalar_select %p33, %s34, %s35
      %p39 = pneg %p33
      %p40 = scmp.eq.s32.totalorder %s10, 1
      %p41 = por %p39, %p40
      %p42 = scmp.ne.s32.totalorder %s34, %s37
      %p43 = scmp.eq.s32.totalorder %s10, 0
      %p44 = por %p42, %p43
      %p45 = scmp.ne.s32.totalorder %s34, %s37
      %p46 = scmp.eq.s32.totalorder %s15, 1
      %p47 = por %p45, %p46
      %p48 = scmp.ne.s32.totalorder %s37, %s38
      %p49 = scmp.eq.s32.totalorder %s15, 0
      %p50 = por %p48, %p49
      %p51 = scmp.ne.s32.totalorder %s37, %s38
      %p52 = scmp.eq.s32.totalorder %s16, 1
      %p53 = por %p51, %p52
      %p55 = scmp.ne.s32.totalorder %s38, %s54
      %p56 = scmp.eq.s32.totalorder %s16, 0
      %p57 = por %p55, %p56
      %s58 = ssub.s32 %s17, %s29
      %s59 = ssub.s32 %s18, %s25
      %s60 = sor.u32 %s58, %s59
      %p61 = scmp.eq.s32.totalorder %s60, 0
      %s63 = sadd.s32 %s62, 1
      %s64 = scalar_select %p61, %s62, %s63
      %p67 = pneg %p61
      %p68 = scmp.eq.s32.totalorder %s10, 1
      %p69 = por %p67, %p68
      %p70 = scmp.ne.s32.totalorder %s62, %s65
      %p71 = scmp.eq.s32.totalorder %s10, 0
      %p72 = por %p70, %p71
      %p73 = scmp.ne.s32.totalorder %s62, %s65
      %p74 = scmp.eq.s32.totalorder %s15, 1
      %p75 = por %p73, %p74
      %p76 = scmp.ne.s32.totalorder %s65, %s66
      %p77 = scmp.eq.s32.totalorder %s15, 0
      %p78 = por %p76, %p77
      %p79 = scmp.ne.s32.totalorder %s65, %s66
      %p80 = scmp.eq.s32.totalorder %s16, 1
      %p81 = por %p79, %p80
      %p83 = scmp.ne.s32.totalorder %s66, %s82
      %p84 = scmp.eq.s32.totalorder %s16, 0
      %p85 = por %p83, %p84
      %p86 = scmp.le.s32.totalorder 1, %s10
      %p87 = scmp.lt.s32.totalorder %s10, 3
      %p88 = pnand %p86, %p87
      %p89 = pneg %p88
      // Predicated region
      $region9: #{tpu_custom_call.1} parent=5 // pred_check
        _
      $region10: #{tpu_custom_call.1} parent=5 // pred_check_branch
        %91 = sbr.rel (%p88) target = $region12
      $region11: #{tpu_custom_call.1} parent=5 // pred_region
        %s92 = ssub.s32 %s10, 1
      $region12: #{tpu_custom_call.1} parent=5 // pred_fallthru
        _
      %p93 = scmp.lt.s32.totalorder %s10, 2
      // Predicated region
      $region13: #{tpu_custom_call.1} parent=5 // pred_check
        %p94 = pneg %p93
      $region14: #{tpu_custom_call.1} parent=5 // pred_check_branch
        %96 = sbr.rel (%p94) target = $region16
      $region15: #{tpu_custom_call.1} parent=5 // pred_region
        // Predicated region
        $region17: #{tpu_custom_call.1} parent=15 // pred_check
          %p97 = pneg %p44
        $region18: #{tpu_custom_call.1} parent=15 // pred_check_branch
          %99 = sbr.rel (%p97) target = $region20
        $region19: #{tpu_custom_call.1} parent=15 // pred_region
          %s100 = sand.u32 %s34, 1
          %s101 = scalar_lea.sflag [#allocation3], %s100
          %s102 = sand.u32 %s34, 1
          %s103 = smul.addr %s102, 64
          %s104 = scalar_lea.vmem [#allocation2], %s103
          %s105 = smul.u32 4, %s18
          %s107 = ssub.s32 1024, 1024
          %108 = vsyncadd %s101, %s107
          %s109 = smul.addr %s105, 2
          %s110 = smul.addr %s17, 8
          %s111 = sadd.s32 %s109, %s110
          %s112 = smul.addr %s111, 128
          %s113 = scalar_lea.hbm %s0, %s112
          %s114 = sshll.u32 %s104, 4
          %s115 = int_to_ptr.vmem [resolvable:$true] %s114
          %120 = dma.hbm_to_vmem [thread:$0]  %s113, 1024, %s115, %s101, 128, 128, 8
        $region20: #{tpu_custom_call.1} parent=15 // pred_fallthru
          _
      $region16: #{tpu_custom_call.1} parent=5 // pred_fallthru
        _
      %p121 = scmp.le.s32.totalorder 1, %s10
      %p122 = scmp.lt.s32.totalorder %s10, 3
      %p123 = pnand %p121, %p122
      %p124 = pneg %p123
      // Predicated region
      $region21: #{tpu_custom_call.1} parent=5 // pred_check
        _
      $region22: #{tpu_custom_call.1} parent=5 // pred_check_branch
        %126 = sbr.rel (%p123) target = $region24
      $region23: #{tpu_custom_call.1} parent=5 // pred_region
        %s127 = ssub.s32 %s10, 1
        %s128 = sand.u32 %s37, 1
        %s129 = scalar_lea.sflag [#allocation3], %s128
        %s130 = sand.u32 %s37, 1
        %s131 = smul.addr %s130, 64
        %s132 = scalar_lea.vmem [#allocation2], %s131
        // Predicated region
        $region25: #{tpu_custom_call.1} parent=23 // pred_check
          %p133 = pneg %p50
        $region26: #{tpu_custom_call.1} parent=23 // pred_check_branch
          %135 = sbr.rel (%p133) target = $region28
        $region27: #{tpu_custom_call.1} parent=23 // pred_region
          %136 = dma.done %s129, 1024
        $region28: #{tpu_custom_call.1} parent=23 // pred_fallthru
          _
        %s137 = sand.u32 %s37, 1
        %s138 = scalar_lea.sflag [#allocation3], %s137
        %s139 = sand.u32 %s37, 1
        %s140 = smul.addr %s139, 64
        %s141 = scalar_lea.vmem [#allocation2], %s140
        %p142 = pneg %p50
        %p143 = pneg %p47
        %p144 = pneg %p78
        %p145 = pneg %p75
        %s146 = smul.u32 4, %s20
        %p147 = scmp.lt.s32.totalorder %s19, 1
        %s148 = scalar_select %p147, %s19, 1
        %p149 = scmp.lt.s32.totalorder %s146, 3
        %s150 = scalar_select %p149, %s146, 3
        %s151 = smul.addr %s148, 8
        %s152 = sadd.s32 %s150, %s151
        %s153 = smul.addr %s152, 8
        %s154 = scalar_lea.vmem %s1, %s153
        %s155 = smul.u32 4, %s20
        %s156 = smul.u32 4, %s20
        %p157 = scmp.lt.s32.totalorder %s19, 1
        %s158 = scalar_select %p157, %s19, 1
        %p159 = scmp.lt.s32.totalorder %s156, 3
        %s160 = scalar_select %p159, %s156, 3
        %s161 = smul.addr %s158, 8
        %s162 = sadd.s32 %s160, %s161
        %s163 = smul.addr %s162, 8
        %s164 = scalar_lea.vmem %s1, %s163
        %s165 = smul.u32 4, %s20
        %v166 = vld [vmem:[%s132] sm:$0xf]
        %v167 = vld [vmem:[%s132 + $0x10] sm:$0xf]
        %v168 = vld [vmem:[%s132 + $0x20] sm:$0xf]
        %v169 = vld [vmem:[%s132 + $0x30] sm:$0xf]
        %vm170 = vcmask 125952
        %v171 = vsel %vm170, %v166, -inf
        %v172 = vrot.slane %v171, 4
        %v173 = vmax.f32 %v171, %v172
        %v174 = vrot.slane %v173, 2
        %v175 = vmax.f32 %v173, %v174
        %v176 = vrot.slane %v175, 1
        %v177 = vmax.f32 %v175, %v176
        %v178 = vsel %vm170, %v167, -inf
        %v179 = vrot.slane %v178, 4
        %v180 = vmax.f32 %v178, %v179
        %v181 = vrot.slane %v180, 2
        %v182 = vmax.f32 %v180, %v181
        %v183 = vrot.slane %v182, 1
        %v184 = vmax.f32 %v182, %v183
        %v185 = vsel %vm170, %v168, -inf
        %v186 = vrot.slane %v185, 4
        %v187 = vmax.f32 %v185, %v186
        %v188 = vrot.slane %v187, 2
        %v189 = vmax.f32 %v187, %v188
        %v190 = vrot.slane %v189, 1
        %v191 = vmax.f32 %v189, %v190
        %v192 = vsel %vm170, %v169, -inf
        %v193 = vrot.slane %v192, 4
        %v194 = vmax.f32 %v192, %v193
        %v195 = vrot.slane %v194, 2
        %v196 = vmax.f32 %v194, %v195
        %v197 = vrot.slane %v196, 1
        %v198 = vmax.f32 %v196, %v197
        %v199 = vsel %vm170, %v166, 0.0
        %v200 = vrot.slane %v199, 4
        %v201 = vadd.f32 %v199, %v200
        %v202 = vrot.slane %v201, 2
        %v203 = vadd.f32 %v201, %v202
        %v204 = vrot.slane %v203, 1
        %v205 = vadd.f32 %v203, %v204
        %v206 = vsel %vm170, %v167, 0.0
        %v207 = vrot.slane %v206, 4
        %v208 = vadd.f32 %v206, %v207
        %v209 = vrot.slane %v208, 2
        %v210 = vadd.f32 %v208, %v209
        %v211 = vrot.slane %v210, 1
        %v212 = vadd.f32 %v210, %v211
        %v213 = vsel %vm170, %v168, 0.0
        %v214 = vrot.slane %v213, 4
        %v215 = vadd.f32 %v213, %v214
        %v216 = vrot.slane %v215, 2
        %v217 = vadd.f32 %v215, %v216
        %v218 = vrot.slane %v217, 1
        %v219 = vadd.f32 %v217, %v218
        %v220 = vsel %vm170, %v169, 0.0
        %v221 = vrot.slane %v220, 4
        %v222 = vadd.f32 %v220, %v221
        %v223 = vrot.slane %v222, 2
        %v224 = vadd.f32 %v222, %v223
        %v225 = vrot.slane %v224, 1
        %v226 = vadd.f32 %v224, %v225
        %vm231 = vcmask 1041409
        %v232 = vsel %vm231, %v184, %v177
        %vm233 = vcmask 1042434
        %v234 = vsel %vm233, %v191, %v232
        %vm235 = vcmask 1043459
        %v236 = vsel %vm235, %v198, %v234
        %vm238 = vcmask 19456
        %v239 = vsel %vm238, %v236, -inf
        %240 = vmax.xlane.f32.xlu0 %v239
        %v241 = vpop.xlane.xlu0 %240
        %v246 = vsel %vm231, %v212, %v205
        %v247 = vsel %vm233, %v219, %v246
        %v248 = vsel %vm235, %v226, %v247
        %v250 = vsel %vm238, %v248, 0.0
        %251 = vadd.xlane.f32.xlu0 %v250
        %v252 = vpop.xlane.xlu0 %251
        %v253 = vmul.f32 %v252, 0.083333336
        %vm254 = vcmask 35856
        %v255 = vsel %vm254, %v236, -inf
        %256 = vmax.xlane.f32.xlu0 %v255
        %v257 = vpop.xlane.xlu0 %256
        %258 = vrot.lane.b32.xlu0 %v248, 126
        %v259 = vpop.permute.xlu0 %258
        %v261 = vsel %vm238, %v259, 0.0
        %262 = vadd.xlane.f32.xlu0 %v261
        %v263 = vpop.xlane.xlu0 %262
        %v264 = vmul.f32 %v263, 0.083333336
        %vm265 = vcmask 52256
        %v266 = vsel %vm265, %v236, -inf
        %267 = vmax.xlane.f32.xlu0 %v266
        %v268 = vpop.xlane.xlu0 %267
        %269 = vrot.lane.b32.xlu0 %v248, 124
        %v270 = vpop.permute.xlu0 %269
        %v272 = vsel %vm238, %v270, 0.0
        %273 = vadd.xlane.f32.xlu0 %v272
        %v274 = vpop.xlane.xlu0 %273
        %v275 = vmul.f32 %v274, 0.083333336
        %vm276 = vcmask 76848
        %v277 = vsel %vm276, %v236, -inf
        %278 = vmax.xlane.f32.xlu0 %v277
        %v279 = vpop.xlane.xlu0 %278
        %280 = vrot.lane.b32.xlu0 %v248, 122
        %v281 = vpop.permute.xlu0 %280
        %vm283 = vcmask 27648
        %v284 = vsel %vm283, %v281, 0.0
        %285 = vadd.xlane.f32.xlu0 %v284
        %v286 = vpop.xlane.xlu0 %285
        %v287 = vmul.f32 %v286, 0.0625
        %vm288 = vcmask 93256
        %v289 = vsel %vm288, %v236, -inf
        %290 = vmax.xlane.f32.xlu0 %v289
        %v291 = vpop.xlane.xlu0 %290
        %292 = vrot.lane.b32.xlu0 %v248, 119
        %v293 = vpop.permute.xlu0 %292
        %v295 = vsel %vm238, %v293, 0.0
        %296 = vadd.xlane.f32.xlu0 %v295
        %v297 = vpop.xlane.xlu0 %296
        %v298 = vmul.f32 %v297, 0.083333336
        %vm299 = vcmask 109656
        %v300 = vsel %vm299, %v236, -inf
        %301 = vmax.xlane.f32.xlu0 %v300
        %v302 = vpop.xlane.xlu0 %301
        %303 = vrot.lane.b32.xlu0 %v248, 117
        %v304 = vpop.permute.xlu0 %303
        %v306 = vsel %vm238, %v304, 0.0
        %307 = vadd.xlane.f32.xlu0 %v306
        %v308 = vpop.xlane.xlu0 %307
        %v309 = vmul.f32 %v308, 0.083333336
        %vm310 = vcmask 126056
        %v311 = vsel %vm310, %v236, -inf
        %312 = vmax.xlane.f32.xlu0 %v311
        %v313 = vpop.xlane.xlu0 %312
        %314 = vrot.lane.b32.xlu0 %v248, 115
        %v315 = vpop.permute.xlu0 %314
        %v317 = vsel %vm238, %v315, 0.0
        %318 = vadd.xlane.f32.xlu0 %v317
        %v319 = vpop.xlane.xlu0 %318
        %v320 = vmul.f32 %v319, 0.083333336
        %vm321 = vcmask 7168
        %v322 = vsel %vm321, %v241, %v257
        %vm323 = vcmask 15360
        %v324 = vsel %vm323, %v322, %v268
        %vm325 = vcmask 23552
        %v326 = vsel %vm325, %v324, %v279
        %vm327 = vcmask 31744
        %v328 = vsel %vm327, %v326, %v291
        %vm329 = vcmask 39936
        %v330 = vsel %vm329, %v328, %v302
        %vm331 = vcmask 48128
        %v332 = vsel %vm331, %v330, %v313
        %v335 = vunpack.c.l.s4 1966171168
        %v336 = vunpack.c.0.s8 %v335
        %v337 = vlaneseq
        %v338 = vshrl.u32 %v337, 7
        %v339 = vsub.s32 %v336, %v338
        %v340 = vrot.slane %v332, %v339
        %v341 = vcombine.high %v340, %v340
        %v343 = vunpack.c.l.s4 1966171168
        %v344 = vunpack.c.0.s8 %v343
        %v345 = vlaneseq
        %v346 = vshrl.u32 %v345, 7
        %v347 = vsub.s32 %v344, %v346
        %v348 = vrot.slane %v340, %v347
        %v350 = vunpack.c.l.s4 1966171168
        %v351 = vunpack.c.0.s8 %v350
        %v352 = vlaneseq
        %v353 = vshrl.u32 %v352, 7
        %v354 = vsub.s32 %v351, %v353
        %v355 = vrot.slane %v341, %v354
        %v356 = vcombine.high %v348, %v348
        %v357 = vcombine.high %v355, %v355
        %v362 = vsel %vm321, %v253, %v264
        %v363 = vsel %vm323, %v362, %v275
        %v364 = vsel %vm325, %v363, %v287
        %v365 = vsel %vm327, %v364, %v298
        %v366 = vsel %vm329, %v365, %v309
        %v367 = vsel %vm331, %v366, %v320
        %v370 = vunpack.c.l.s4 1966171168
        %v371 = vunpack.c.0.s8 %v370
        %v372 = vlaneseq
        %v373 = vshrl.u32 %v372, 7
        %v374 = vsub.s32 %v371, %v373
        %v375 = vrot.slane %v367, %v374
        %v376 = vcombine.high %v375, %v375
        %v378 = vunpack.c.l.s4 1966171168
        %v379 = vunpack.c.0.s8 %v378
        %v380 = vlaneseq
        %v381 = vshrl.u32 %v380, 7
        %v382 = vsub.s32 %v379, %v381
        %v383 = vrot.slane %v375, %v382
        %v385 = vunpack.c.l.s4 1966171168
        %v386 = vunpack.c.0.s8 %v385
        %v387 = vlaneseq
        %v388 = vshrl.u32 %v387, 7
        %v389 = vsub.s32 %v386, %v388
        %v390 = vrot.slane %v376, %v389
        %v391 = vcombine.high %v383, %v383
        %v392 = vcombine.high %v390, %v390
        %v397 = vld [vmem:[%s132 + $0x3] sm:$0xf]
        %v398 = vld [vmem:[%s132 + $0x13] sm:$0xf]
        %v399 = vld [vmem:[%s132 + $0x23] sm:$0xf]
        %v400 = vld [vmem:[%s132 + $0x33] sm:$0xf]
        %v401 = vsel %vm170, %v397, -inf
        %v402 = vrot.slane %v401, 4
        %v403 = vmax.f32 %v401, %v402
        %v404 = vrot.slane %v403, 2
        %v405 = vmax.f32 %v403, %v404
        %v406 = vrot.slane %v405, 1
        %v407 = vmax.f32 %v405, %v406
        %v408 = vsel %vm170, %v398, -inf
        %v409 = vrot.slane %v408, 4
        %v410 = vmax.f32 %v408, %v409
        %v411 = vrot.slane %v410, 2
        %v412 = vmax.f32 %v410, %v411
        %v413 = vrot.slane %v412, 1
        %v414 = vmax.f32 %v412, %v413
        %v415 = vsel %vm170, %v399, -inf
        %v416 = vrot.slane %v415, 4
        %v417 = vmax.f32 %v415, %v416
        %v418 = vrot.slane %v417, 2
        %v419 = vmax.f32 %v417, %v418
        %v420 = vrot.slane %v419, 1
        %v421 = vmax.f32 %v419, %v420
        %v422 = vsel %vm170, %v400, -inf
        %v423 = vrot.slane %v422, 4
        %v424 = vmax.f32 %v422, %v423
        %v425 = vrot.slane %v424, 2
        %v426 = vmax.f32 %v424, %v425
        %v427 = vrot.slane %v426, 1
        %v428 = vmax.f32 %v426, %v427
        %v429 = vsel %vm170, %v397, 0.0
        %v430 = vrot.slane %v429, 4
        %v431 = vadd.f32 %v429, %v430
        %v432 = vrot.slane %v431, 2
        %v433 = vadd.f32 %v431, %v432
        %v434 = vrot.slane %v433, 1
        %v435 = vadd.f32 %v433, %v434
        %v436 = vsel %vm170, %v398, 0.0
        %v437 = vrot.slane %v436, 4
        %v438 = vadd.f32 %v436, %v437
        %v439 = vrot.slane %v438, 2
        %v440 = vadd.f32 %v438, %v439
        %v441 = vrot.slane %v440, 1
        %v442 = vadd.f32 %v440, %v441
        %v443 = vsel %vm170, %v399, 0.0
        %v444 = vrot.slane %v443, 4
        %v445 = vadd.f32 %v443, %v444
        %v446 = vrot.slane %v445, 2
        %v447 = vadd.f32 %v445, %v446
        %v448 = vrot.slane %v447, 1
        %v449 = vadd.f32 %v447, %v448
        %v450 = vsel %vm170, %v400, 0.0
        %v451 = vrot.slane %v450, 4
        %v452 = vadd.f32 %v450, %v451
        %v453 = vrot.slane %v452, 2
        %v454 = vadd.f32 %v452, %v453
        %v455 = vrot.slane %v454, 1
        %v456 = vadd.f32 %v454, %v455
        %v461 = vsel %vm231, %v414, %v407
        %v462 = vsel %vm233, %v421, %v461
        %v463 = vsel %vm235, %v428, %v462
        %v465 = vsel %vm238, %v463, -inf
        %466 = vmax.xlane.f32.xlu0 %v465
        %v467 = vpop.xlane.xlu0 %466
        %v472 = vsel %vm231, %v442, %v435
        %v473 = vsel %vm233, %v449, %v472
        %v474 = vsel %vm235, %v456, %v473
        %v476 = vsel %vm238, %v474, 0.0
        %477 = vadd.xlane.f32.xlu0 %v476
        %v478 = vpop.xlane.xlu0 %477
        %v479 = vmul.f32 %v478, 0.083333336
        %v480 = vsel %vm254, %v463, -inf
        %481 = vmax.xlane.f32.xlu0 %v480
        %v482 = vpop.xlane.xlu0 %481
        %483 = vrot.lane.b32.xlu0 %v474, 126
        %v484 = vpop.permute.xlu0 %483
        %v486 = vsel %vm238, %v484, 0.0
        %487 = vadd.xlane.f32.xlu0 %v486
        %v488 = vpop.xlane.xlu0 %487
        %v489 = vmul.f32 %v488, 0.083333336
        %v490 = vsel %vm265, %v463, -inf
        %491 = vmax.xlane.f32.xlu0 %v490
        %v492 = vpop.xlane.xlu0 %491
        %493 = vrot.lane.b32.xlu0 %v474, 124
        %v494 = vpop.permute.xlu0 %493
        %v496 = vsel %vm238, %v494, 0.0
        %497 = vadd.xlane.f32.xlu0 %v496
        %v498 = vpop.xlane.xlu0 %497
        %v499 = vmul.f32 %v498, 0.083333336
        %v500 = vsel %vm276, %v463, -inf
        %501 = vmax.xlane.f32.xlu0 %v500
        %v502 = vpop.xlane.xlu0 %501
        %503 = vrot.lane.b32.xlu0 %v474, 122
        %v504 = vpop.permute.xlu0 %503
        %v506 = vsel %vm283, %v504, 0.0
        %507 = vadd.xlane.f32.xlu0 %v506
        %v508 = vpop.xlane.xlu0 %507
        %v509 = vmul.f32 %v508, 0.0625
        %v510 = vsel %vm288, %v463, -inf
        %511 = vmax.xlane.f32.xlu0 %v510
        %v512 = vpop.xlane.xlu0 %511
        %513 = vrot.lane.b32.xlu0 %v474, 119
        %v514 = vpop.permute.xlu0 %513
        %v516 = vsel %vm238, %v514, 0.0
        %517 = vadd.xlane.f32.xlu0 %v516
        %v518 = vpop.xlane.xlu0 %517
        %v519 = vmul.f32 %v518, 0.083333336
        %v520 = vsel %vm299, %v463, -inf
        %521 = vmax.xlane.f32.xlu0 %v520
        %v522 = vpop.xlane.xlu0 %521
        %523 = vrot.lane.b32.xlu0 %v474, 117
        %v524 = vpop.permute.xlu0 %523
        %v526 = vsel %vm238, %v524, 0.0
        %527 = vadd.xlane.f32.xlu0 %v526
        %v528 = vpop.xlane.xlu0 %527
        %v529 = vmul.f32 %v528, 0.083333336
        %v530 = vsel %vm310, %v463, -inf
        %531 = vmax.xlane.f32.xlu0 %v530
        %v532 = vpop.xlane.xlu0 %531
        %533 = vrot.lane.b32.xlu0 %v474, 115
        %v534 = vpop.permute.xlu0 %533
        %v536 = vsel %vm238, %v534, 0.0
        %537 = vadd.xlane.f32.xlu0 %v536
        %v538 = vpop.xlane.xlu0 %537
        %v539 = vmul.f32 %v538, 0.083333336
        %v540 = vsel %vm321, %v467, %v482
        %v541 = vsel %vm323, %v540, %v492
        %v542 = vsel %vm325, %v541, %v502
        %v543 = vsel %vm327, %v542, %v512
        %v544 = vsel %vm329, %v543, %v522
        %v545 = vsel %vm331, %v544, %v532
        %v548 = vunpack.c.l.s4 1966171168
        %v549 = vunpack.c.0.s8 %v548
        %v550 = vlaneseq
        %v551 = vshrl.u32 %v550, 7
        %v552 = vsub.s32 %v549, %v551
        %v553 = vrot.slane %v545, %v552
        %v554 = vcombine.high %v553, %v553
        %v556 = vunpack.c.l.s4 1966171168
        %v557 = vunpack.c.0.s8 %v556
        %v558 = vlaneseq
        %v559 = vshrl.u32 %v558, 7
        %v560 = vsub.s32 %v557, %v559
        %v561 = vrot.slane %v553, %v560
        %v563 = vunpack.c.l.s4 1966171168
        %v564 = vunpack.c.0.s8 %v563
        %v565 = vlaneseq
        %v566 = vshrl.u32 %v565, 7
        %v567 = vsub.s32 %v564, %v566
        %v568 = vrot.slane %v554, %v567
        %v569 = vcombine.high %v561, %v561
        %v570 = vcombine.high %v568, %v568
        %v571 = vsel %vm321, %v479, %v489
        %v572 = vsel %vm323, %v571, %v499
        %v573 = vsel %vm325, %v572, %v509
        %v574 = vsel %vm327, %v573, %v519
        %v575 = vsel %vm329, %v574, %v529
        %v576 = vsel %vm331, %v575, %v539
        %v579 = vunpack.c.l.s4 1966171168
        %v580 = vunpack.c.0.s8 %v579
        %v581 = vlaneseq
        %v582 = vshrl.u32 %v581, 7
        %v583 = vsub.s32 %v580, %v582
        %v584 = vrot.slane %v576, %v583
        %v585 = vcombine.high %v584, %v584
        %v587 = vunpack.c.l.s4 1966171168
        %v588 = vunpack.c.0.s8 %v587
        %v589 = vlaneseq
        %v590 = vshrl.u32 %v589, 7
        %v591 = vsub.s32 %v588, %v590
        %v592 = vrot.slane %v584, %v591
        %v594 = vunpack.c.l.s4 1966171168
        %v595 = vunpack.c.0.s8 %v594
        %v596 = vlaneseq
        %v597 = vshrl.u32 %v596, 7
        %v598 = vsub.s32 %v595, %v597
        %v599 = vrot.slane %v585, %v598
        %v600 = vcombine.high %v592, %v592
        %v601 = vcombine.high %v599, %v599
        %v602 = vld [vmem:[%s132 + $0x6] sm:$0xf]
        %v603 = vld [vmem:[%s132 + $0x16] sm:$0xf]
        %v604 = vld [vmem:[%s132 + $0x26] sm:$0xf]
        %v605 = vld [vmem:[%s132 + $0x36] sm:$0xf]
        %v606 = vsel %vm170, %v602, -inf
        %v607 = vrot.slane %v606, 4
        %v608 = vmax.f32 %v606, %v607
        %v609 = vrot.slane %v608, 2
        %v610 = vmax.f32 %v608, %v609
        %v611 = vrot.slane %v610, 1
        %v612 = vmax.f32 %v610, %v611
        %v613 = vsel %vm170, %v603, -inf
        %v614 = vrot.slane %v613, 4
        %v615 = vmax.f32 %v613, %v614
        %v616 = vrot.slane %v615, 2
        %v617 = vmax.f32 %v615, %v616
        %v618 = vrot.slane %v617, 1
        %v619 = vmax.f32 %v617, %v618
        %v620 = vsel %vm170, %v604, -inf
        %v621 = vrot.slane %v620, 4
        %v622 = vmax.f32 %v620, %v621
        %v623 = vrot.slane %v622, 2
        %v624 = vmax.f32 %v622, %v623
        %v625 = vrot.slane %v624, 1
        %v626 = vmax.f32 %v624, %v625
        %v627 = vsel %vm170, %v605, -inf
        %v628 = vrot.slane %v627, 4
        %v629 = vmax.f32 %v627, %v628
        %v630 = vrot.slane %v629, 2
        %v631 = vmax.f32 %v629, %v630
        %v632 = vrot.slane %v631, 1
        %v633 = vmax.f32 %v631, %v632
        %v634 = vsel %vm170, %v602, 0.0
        %v635 = vrot.slane %v634, 4
        %v636 = vadd.f32 %v634, %v635
        %v637 = vrot.slane %v636, 2
        %v638 = vadd.f32 %v636, %v637
        %v639 = vrot.slane %v638, 1
        %v640 = vadd.f32 %v638, %v639
        %v641 = vsel %vm170, %v603, 0.0
        %v642 = vrot.slane %v641, 4
        %v643 = vadd.f32 %v641, %v642
        %v644 = vrot.slane %v643, 2
        %v645 = vadd.f32 %v643, %v644
        %v646 = vrot.slane %v645, 1
        %v647 = vadd.f32 %v645, %v646
        %v648 = vsel %vm170, %v604, 0.0
        %v649 = vrot.slane %v648, 4
        %v650 = vadd.f32 %v648, %v649
        %v651 = vrot.slane %v650, 2
        %v652 = vadd.f32 %v650, %v651
        %v653 = vrot.slane %v652, 1
        %v654 = vadd.f32 %v652, %v653
        %v655 = vsel %vm170, %v605, 0.0
        %v656 = vrot.slane %v655, 4
        %v657 = vadd.f32 %v655, %v656
        %v658 = vrot.slane %v657, 2
        %v659 = vadd.f32 %v657, %v658
        %v660 = vrot.slane %v659, 1
        %v661 = vadd.f32 %v659, %v660
        %v666 = vsel %vm231, %v619, %v612
        %v667 = vsel %vm233, %v626, %v666
        %v668 = vsel %vm235, %v633, %v667
        %v670 = vsel %vm238, %v668, -inf
        %671 = vmax.xlane.f32.xlu0 %v670
        %v672 = vpop.xlane.xlu0 %671
        %v677 = vsel %vm231, %v647, %v640
        %v678 = vsel %vm233, %v654, %v677
        %v679 = vsel %vm235, %v661, %v678
        %v681 = vsel %vm238, %v679, 0.0
        %682 = vadd.xlane.f32.xlu0 %v681
        %v683 = vpop.xlane.xlu0 %682
        %v684 = vmul.f32 %v683, 0.083333336
        %v685 = vsel %vm254, %v668, -inf
        %686 = vmax.xlane.f32.xlu0 %v685
        %v687 = vpop.xlane.xlu0 %686
        %688 = vrot.lane.b32.xlu0 %v679, 126
        %v689 = vpop.permute.xlu0 %688
        %v691 = vsel %vm238, %v689, 0.0
        %692 = vadd.xlane.f32.xlu0 %v691
        %v693 = vpop.xlane.xlu0 %692
        %v694 = vmul.f32 %v693, 0.083333336
        %v695 = vsel %vm265, %v668, -inf
        %696 = vmax.xlane.f32.xlu0 %v695
        %v697 = vpop.xlane.xlu0 %696
        %698 = vrot.lane.b32.xlu0 %v679, 124
        %v699 = vpop.permute.xlu0 %698
        %v701 = vsel %vm238, %v699, 0.0
        %702 = vadd.xlane.f32.xlu0 %v701
        %v703 = vpop.xlane.xlu0 %702
        %v704 = vmul.f32 %v703, 0.083333336
        %v705 = vsel %vm276, %v668, -inf
        %706 = vmax.xlane.f32.xlu0 %v705
        %v707 = vpop.xlane.xlu0 %706
        %708 = vrot.lane.b32.xlu0 %v679, 122
        %v709 = vpop.permute.xlu0 %708
        %v711 = vsel %vm283, %v709, 0.0
        %712 = vadd.xlane.f32.xlu0 %v711
        %v713 = vpop.xlane.xlu0 %712
        %v714 = vmul.f32 %v713, 0.0625
        %v715 = vsel %vm288, %v668, -inf
        %716 = vmax.xlane.f32.xlu0 %v715
        %v717 = vpop.xlane.xlu0 %716
        %718 = vrot.lane.b32.xlu0 %v679, 119
        %v719 = vpop.permute.xlu0 %718
        %v721 = vsel %vm238, %v719, 0.0
        %722 = vadd.xlane.f32.xlu0 %v721
        %v723 = vpop.xlane.xlu0 %722
        %v724 = vmul.f32 %v723, 0.083333336
        %v725 = vsel %vm299, %v668, -inf
        %726 = vmax.xlane.f32.xlu0 %v725
        %v727 = vpop.xlane.xlu0 %726
        %728 = vrot.lane.b32.xlu0 %v679, 117
        %v729 = vpop.permute.xlu0 %728
        %v731 = vsel %vm238, %v729, 0.0
        %732 = vadd.xlane.f32.xlu0 %v731
        %v733 = vpop.xlane.xlu0 %732
        %v734 = vmul.f32 %v733, 0.083333336
        %v735 = vsel %vm310, %v668, -inf
        %736 = vmax.xlane.f32.xlu0 %v735
        %v737 = vpop.xlane.xlu0 %736
        %738 = vrot.lane.b32.xlu0 %v679, 115
        %v739 = vpop.permute.xlu0 %738
        %v741 = vsel %vm238, %v739, 0.0
        %742 = vadd.xlane.f32.xlu0 %v741
        %v743 = vpop.xlane.xlu0 %742
        %v744 = vmul.f32 %v743, 0.083333336
        %v745 = vsel %vm321, %v672, %v687
        %v746 = vsel %vm323, %v745, %v697
        %v747 = vsel %vm325, %v746, %v707
        %v748 = vsel %vm327, %v747, %v717
        %v749 = vsel %vm329, %v748, %v727
        %v750 = vsel %vm331, %v749, %v737
        %v753 = vunpack.c.l.s4 1966171168
        %v754 = vunpack.c.0.s8 %v753
        %v755 = vlaneseq
        %v756 = vshrl.u32 %v755, 7
        %v757 = vsub.s32 %v754, %v756
        %v758 = vrot.slane %v750, %v757
        %v759 = vcombine.high %v758, %v758
        %v761 = vunpack.c.l.s4 1966171168
        %v762 = vunpack.c.0.s8 %v761
        %v763 = vlaneseq
        %v764 = vshrl.u32 %v763, 7
        %v765 = vsub.s32 %v762, %v764
        %v766 = vrot.slane %v758, %v765
        %v768 = vunpack.c.l.s4 1966171168
        %v769 = vunpack.c.0.s8 %v768
        %v770 = vlaneseq
        %v771 = vshrl.u32 %v770, 7
        %v772 = vsub.s32 %v769, %v771
        %v773 = vrot.slane %v759, %v772
        %v774 = vcombine.high %v766, %v766
        %v775 = vcombine.high %v773, %v773
        %v776 = vsel %vm321, %v684, %v694
        %v777 = vsel %vm323, %v776, %v704
        %v778 = vsel %vm325, %v777, %v714
        %v779 = vsel %vm327, %v778, %v724
        %v780 = vsel %vm329, %v779, %v734
        %v781 = vsel %vm331, %v780, %v744
        %v784 = vunpack.c.l.s4 1966171168
        %v785 = vunpack.c.0.s8 %v784
        %v786 = vlaneseq
        %v787 = vshrl.u32 %v786, 7
        %v788 = vsub.s32 %v785, %v787
        %v789 = vrot.slane %v781, %v788
        %v790 = vcombine.high %v789, %v789
        %v792 = vunpack.c.l.s4 1966171168
        %v793 = vunpack.c.0.s8 %v792
        %v794 = vlaneseq
        %v795 = vshrl.u32 %v794, 7
        %v796 = vsub.s32 %v793, %v795
        %v797 = vrot.slane %v789, %v796
        %v799 = vunpack.c.l.s4 1966171168
        %v800 = vunpack.c.0.s8 %v799
        %v801 = vlaneseq
        %v802 = vshrl.u32 %v801, 7
        %v803 = vsub.s32 %v800, %v802
        %v804 = vrot.slane %v790, %v803
        %v805 = vcombine.high %v797, %v797
        %v806 = vcombine.high %v804, %v804
        %v807 = vld [vmem:[%s132 + $0x9] sm:$0xf]
        %v808 = vld [vmem:[%s132 + $0x19] sm:$0xf]
        %v809 = vld [vmem:[%s132 + $0x29] sm:$0xf]
        %v810 = vld [vmem:[%s132 + $0x39] sm:$0xf]
        %v811 = vsel %vm170, %v807, -inf
        %v812 = vrot.slane %v811, 4
        %v813 = vmax.f32 %v811, %v812
        %v814 = vrot.slane %v813, 2
        %v815 = vmax.f32 %v813, %v814
        %v816 = vrot.slane %v815, 1
        %v817 = vmax.f32 %v815, %v816
        %v818 = vsel %vm170, %v808, -inf
        %v819 = vrot.slane %v818, 4
        %v820 = vmax.f32 %v818, %v819
        %v821 = vrot.slane %v820, 2
        %v822 = vmax.f32 %v820, %v821
        %v823 = vrot.slane %v822, 1
        %v824 = vmax.f32 %v822, %v823
        %v825 = vsel %vm170, %v809, -inf
        %v826 = vrot.slane %v825, 4
        %v827 = vmax.f32 %v825, %v826
        %v828 = vrot.slane %v827, 2
        %v829 = vmax.f32 %v827, %v828
        %v830 = vrot.slane %v829, 1
        %v831 = vmax.f32 %v829, %v830
        %v832 = vsel %vm170, %v810, -inf
        %v833 = vrot.slane %v832, 4
        %v834 = vmax.f32 %v832, %v833
        %v835 = vrot.slane %v834, 2
        %v836 = vmax.f32 %v834, %v835
        %v837 = vrot.slane %v836, 1
        %v838 = vmax.f32 %v836, %v837
        %v839 = vsel %vm170, %v807, 0.0
        %v840 = vrot.slane %v839, 4
        %v841 = vadd.f32 %v839, %v840
        %v842 = vrot.slane %v841, 2
        %v843 = vadd.f32 %v841, %v842
        %v844 = vrot.slane %v843, 1
        %v845 = vadd.f32 %v843, %v844
        %v846 = vsel %vm170, %v808, 0.0
        %v847 = vrot.slane %v846, 4
        %v848 = vadd.f32 %v846, %v847
        %v849 = vrot.slane %v848, 2
        %v850 = vadd.f32 %v848, %v849
        %v851 = vrot.slane %v850, 1
        %v852 = vadd.f32 %v850, %v851
        %v853 = vsel %vm170, %v809, 0.0
        %v854 = vrot.slane %v853, 4
        %v855 = vadd.f32 %v853, %v854
        %v856 = vrot.slane %v855, 2
        %v857 = vadd.f32 %v855, %v856
        %v858 = vrot.slane %v857, 1
        %v859 = vadd.f32 %v857, %v858
        %v860 = vsel %vm170, %v810, 0.0
        %v861 = vrot.slane %v860, 4
        %v862 = vadd.f32 %v860, %v861
        %v863 = vrot.slane %v862, 2
        %v864 = vadd.f32 %v862, %v863
        %v865 = vrot.slane %v864, 1
        %v866 = vadd.f32 %v864, %v865
        %v871 = vsel %vm231, %v824, %v817
        %v872 = vsel %vm233, %v831, %v871
        %v873 = vsel %vm235, %v838, %v872
        %v875 = vsel %vm238, %v873, -inf
        %876 = vmax.xlane.f32.xlu0 %v875
        %v877 = vpop.xlane.xlu0 %876
        %v882 = vsel %vm231, %v852, %v845
        %v883 = vsel %vm233, %v859, %v882
        %v884 = vsel %vm235, %v866, %v883
        %v886 = vsel %vm238, %v884, 0.0
        %887 = vadd.xlane.f32.xlu0 %v886
        %v888 = vpop.xlane.xlu0 %887
        %v889 = vmul.f32 %v888, 0.083333336
        %v890 = vsel %vm254, %v873, -inf
        %891 = vmax.xlane.f32.xlu0 %v890
        %v892 = vpop.xlane.xlu0 %891
        %893 = vrot.lane.b32.xlu0 %v884, 126
        %v894 = vpop.permute.xlu0 %893
        %v896 = vsel %vm238, %v894, 0.0
        %897 = vadd.xlane.f32.xlu0 %v896
        %v898 = vpop.xlane.xlu0 %897
        %v899 = vmul.f32 %v898, 0.083333336
        %v900 = vsel %vm265, %v873, -inf
        %901 = vmax.xlane.f32.xlu0 %v900
        %v902 = vpop.xlane.xlu0 %901
        %903 = vrot.lane.b32.xlu0 %v884, 124
        %v904 = vpop.permute.xlu0 %903
        %v906 = vsel %vm238, %v904, 0.0
        %907 = vadd.xlane.f32.xlu0 %v906
        %v908 = vpop.xlane.xlu0 %907
        %v909 = vmul.f32 %v908, 0.083333336
        %v910 = vsel %vm276, %v873, -inf
        %911 = vmax.xlane.f32.xlu0 %v910
        %v912 = vpop.xlane.xlu0 %911
        %913 = vrot.lane.b32.xlu0 %v884, 122
        %v914 = vpop.permute.xlu0 %913
        %v916 = vsel %vm283, %v914, 0.0
        %917 = vadd.xlane.f32.xlu0 %v916
        %v918 = vpop.xlane.xlu0 %917
        %v919 = vmul.f32 %v918, 0.0625
        %v920 = vsel %vm288, %v873, -inf
        %921 = vmax.xlane.f32.xlu0 %v920
        %v922 = vpop.xlane.xlu0 %921
        %923 = vrot.lane.b32.xlu0 %v884, 119
        %v924 = vpop.permute.xlu0 %923
        %v926 = vsel %vm238, %v924, 0.0
        %927 = vadd.xlane.f32.xlu0 %v926
        %v928 = vpop.xlane.xlu0 %927
        %v929 = vmul.f32 %v928, 0.083333336
        %v930 = vsel %vm299, %v873, -inf
        %931 = vmax.xlane.f32.xlu0 %v930
        %v932 = vpop.xlane.xlu0 %931
        %933 = vrot.lane.b32.xlu0 %v884, 117
        %v934 = vpop.permute.xlu0 %933
        %v936 = vsel %vm238, %v934, 0.0
        %937 = vadd.xlane.f32.xlu0 %v936
        %v938 = vpop.xlane.xlu0 %937
        %v939 = vmul.f32 %v938, 0.083333336
        %v940 = vsel %vm310, %v873, -inf
        %941 = vmax.xlane.f32.xlu0 %v940
        %v942 = vpop.xlane.xlu0 %941
        %943 = vrot.lane.b32.xlu0 %v884, 115
        %v944 = vpop.permute.xlu0 %943
        %v946 = vsel %vm238, %v944, 0.0
        %947 = vadd.xlane.f32.xlu0 %v946
        %v948 = vpop.xlane.xlu0 %947
        %v949 = vmul.f32 %v948, 0.083333336
        %v950 = vsel %vm321, %v877, %v892
        %v951 = vsel %vm323, %v950, %v902
        %v952 = vsel %vm325, %v951, %v912
        %v953 = vsel %vm327, %v952, %v922
        %v954 = vsel %vm329, %v953, %v932
        %v955 = vsel %vm331, %v954, %v942
        %v958 = vunpack.c.l.s4 1966171168
        %v959 = vunpack.c.0.s8 %v958
        %v960 = vlaneseq
        %v961 = vshrl.u32 %v960, 7
        %v962 = vsub.s32 %v959, %v961
        %v963 = vrot.slane %v955, %v962
        %v964 = vcombine.high %v963, %v963
        %v966 = vunpack.c.l.s4 1966171168
        %v967 = vunpack.c.0.s8 %v966
        %v968 = vlaneseq
        %v969 = vshrl.u32 %v968, 7
        %v970 = vsub.s32 %v967, %v969
        %v971 = vrot.slane %v963, %v970
        %v973 = vunpack.c.l.s4 1966171168
        %v974 = vunpack.c.0.s8 %v973
        %v975 = vlaneseq
        %v976 = vshrl.u32 %v975, 7
        %v977 = vsub.s32 %v974, %v976
        %v978 = vrot.slane %v964, %v977
        %v979 = vcombine.high %v971, %v971
        %v980 = vcombine.high %v978, %v978
        %v981 = vsel %vm321, %v889, %v899
        %v982 = vsel %vm323, %v981, %v909
        %v983 = vsel %vm325, %v982, %v919
        %v984 = vsel %vm327, %v983, %v929
        %v985 = vsel %vm329, %v984, %v939
        %v986 = vsel %vm331, %v985, %v949
        %v989 = vunpack.c.l.s4 1966171168
        %v990 = vunpack.c.0.s8 %v989
        %v991 = vlaneseq
        %v992 = vshrl.u32 %v991, 7
        %v993 = vsub.s32 %v990, %v992
        %v994 = vrot.slane %v986, %v993
        %v995 = vcombine.high %v994, %v994
        %v997 = vunpack.c.l.s4 1966171168
        %v998 = vunpack.c.0.s8 %v997
        %v999 = vlaneseq
        %v1000 = vshrl.u32 %v999, 7
        %v1001 = vsub.s32 %v998, %v1000
        %v1002 = vrot.slane %v994, %v1001
        %v1004 = vunpack.c.l.s4 1966171168
        %v1005 = vunpack.c.0.s8 %v1004
        %v1006 = vlaneseq
        %v1007 = vshrl.u32 %v1006, 7
        %v1008 = vsub.s32 %v1005, %v1007
        %v1009 = vrot.slane %v995, %v1008
        %v1010 = vcombine.high %v1002, %v1002
        %v1011 = vcombine.high %v1009, %v1009
        %v1012 = vld [vmem:[%s132 + $0xc] sm:$0xf]
        %v1013 = vld [vmem:[%s132 + $0x1c] sm:$0xf]
        %v1014 = vld [vmem:[%s132 + $0x2c] sm:$0xf]
        %v1015 = vld [vmem:[%s132 + $0x3c] sm:$0xf]
        %v1016 = vsel %vm170, %v1012, -inf
        %v1017 = vrot.slane %v1016, 4
        %v1018 = vmax.f32 %v1016, %v1017
        %v1019 = vrot.slane %v1018, 2
        %v1020 = vmax.f32 %v1018, %v1019
        %v1021 = vrot.slane %v1020, 1
        %v1022 = vmax.f32 %v1020, %v1021
        %v1023 = vsel %vm170, %v1013, -inf
        %v1024 = vrot.slane %v1023, 4
        %v1025 = vmax.f32 %v1023, %v1024
        %v1026 = vrot.slane %v1025, 2
        %v1027 = vmax.f32 %v1025, %v1026
        %v1028 = vrot.slane %v1027, 1
        %v1029 = vmax.f32 %v1027, %v1028
        %v1030 = vsel %vm170, %v1014, -inf
        %v1031 = vrot.slane %v1030, 4
        %v1032 = vmax.f32 %v1030, %v1031
        %v1033 = vrot.slane %v1032, 2
        %v1034 = vmax.f32 %v1032, %v1033
        %v1035 = vrot.slane %v1034, 1
        %v1036 = vmax.f32 %v1034, %v1035
        %v1037 = vsel %vm170, %v1015, -inf
        %v1038 = vrot.slane %v1037, 4
        %v1039 = vmax.f32 %v1037, %v1038
        %v1040 = vrot.slane %v1039, 2
        %v1041 = vmax.f32 %v1039, %v1040
        %v1042 = vrot.slane %v1041, 1
        %v1043 = vmax.f32 %v1041, %v1042
        %v1044 = vsel %vm170, %v1012, 0.0
        %v1045 = vrot.slane %v1044, 4
        %v1046 = vadd.f32 %v1044, %v1045
        %v1047 = vrot.slane %v1046, 2
        %v1048 = vadd.f32 %v1046, %v1047
        %v1049 = vrot.slane %v1048, 1
        %v1050 = vadd.f32 %v1048, %v1049
        %v1051 = vsel %vm170, %v1013, 0.0
        %v1052 = vrot.slane %v1051, 4
        %v1053 = vadd.f32 %v1051, %v1052
        %v1054 = vrot.slane %v1053, 2
        %v1055 = vadd.f32 %v1053, %v1054
        %v1056 = vrot.slane %v1055, 1
        %v1057 = vadd.f32 %v1055, %v1056
        %v1058 = vsel %vm170, %v1014, 0.0
        %v1059 = vrot.slane %v1058, 4
        %v1060 = vadd.f32 %v1058, %v1059
        %v1061 = vrot.slane %v1060, 2
        %v1062 = vadd.f32 %v1060, %v1061
        %v1063 = vrot.slane %v1062, 1
        %v1064 = vadd.f32 %v1062, %v1063
        %v1065 = vsel %vm170, %v1015, 0.0
        %v1066 = vrot.slane %v1065, 4
        %v1067 = vadd.f32 %v1065, %v1066
        %v1068 = vrot.slane %v1067, 2
        %v1069 = vadd.f32 %v1067, %v1068
        %v1070 = vrot.slane %v1069, 1
        %v1071 = vadd.f32 %v1069, %v1070
        %v1076 = vsel %vm231, %v1029, %v1022
        %v1077 = vsel %vm233, %v1036, %v1076
        %v1078 = vsel %vm235, %v1043, %v1077
        %v1080 = vsel %vm238, %v1078, -inf
        %1081 = vmax.xlane.f32.xlu0 %v1080
        %v1082 = vpop.xlane.xlu0 %1081
        %v1087 = vsel %vm231, %v1057, %v1050
        %v1088 = vsel %vm233, %v1064, %v1087
        %v1089 = vsel %vm235, %v1071, %v1088
        %v1091 = vsel %vm238, %v1089, 0.0
        %1092 = vadd.xlane.f32.xlu0 %v1091
        %v1093 = vpop.xlane.xlu0 %1092
        %v1094 = vmul.f32 %v1093, 0.083333336
        %v1095 = vsel %vm254, %v1078, -inf
        %1096 = vmax.xlane.f32.xlu0 %v1095
        %v1097 = vpop.xlane.xlu0 %1096
        %1098 = vrot.lane.b32.xlu0 %v1089, 126
        %v1099 = vpop.permute.xlu0 %1098
        %v1101 = vsel %vm238, %v1099, 0.0
        %1102 = vadd.xlane.f32.xlu0 %v1101
        %v1103 = vpop.xlane.xlu0 %1102
        %v1104 = vmul.f32 %v1103, 0.083333336
        %v1105 = vsel %vm265, %v1078, -inf
        %1106 = vmax.xlane.f32.xlu0 %v1105
        %v1107 = vpop.xlane.xlu0 %1106
        %1108 = vrot.lane.b32.xlu0 %v1089, 124
        %v1109 = vpop.permute.xlu0 %1108
        %v1111 = vsel %vm238, %v1109, 0.0
        %1112 = vadd.xlane.f32.xlu0 %v1111
        %v1113 = vpop.xlane.xlu0 %1112
        %v1114 = vmul.f32 %v1113, 0.083333336
        %v1115 = vsel %vm276, %v1078, -inf
        %1116 = vmax.xlane.f32.xlu0 %v1115
        %v1117 = vpop.xlane.xlu0 %1116
        %1118 = vrot.lane.b32.xlu0 %v1089, 122
        %v1119 = vpop.permute.xlu0 %1118
        %v1121 = vsel %vm283, %v1119, 0.0
        %1122 = vadd.xlane.f32.xlu0 %v1121
        %v1123 = vpop.xlane.xlu0 %1122
        %v1124 = vmul.f32 %v1123, 0.0625
        %v1125 = vsel %vm288, %v1078, -inf
        %1126 = vmax.xlane.f32.xlu0 %v1125
        %v1127 = vpop.xlane.xlu0 %1126
        %1128 = vrot.lane.b32.xlu0 %v1089, 119
        %v1129 = vpop.permute.xlu0 %1128
        %v1131 = vsel %vm238, %v1129, 0.0
        %1132 = vadd.xlane.f32.xlu0 %v1131
        %v1133 = vpop.xlane.xlu0 %1132
        %v1134 = vmul.f32 %v1133, 0.083333336
        %v1135 = vsel %vm299, %v1078, -inf
        %1136 = vmax.xlane.f32.xlu0 %v1135
        %v1137 = vpop.xlane.xlu0 %1136
        %1138 = vrot.lane.b32.xlu0 %v1089, 117
        %v1139 = vpop.permute.xlu0 %1138
        %v1141 = vsel %vm238, %v1139, 0.0
        %1142 = vadd.xlane.f32.xlu0 %v1141
        %v1143 = vpop.xlane.xlu0 %1142
        %v1144 = vmul.f32 %v1143, 0.083333336
        %v1145 = vsel %vm310, %v1078, -inf
        %1146 = vmax.xlane.f32.xlu0 %v1145
        %v1147 = vpop.xlane.xlu0 %1146
        %1148 = vrot.lane.b32.xlu0 %v1089, 115
        %v1149 = vpop.permute.xlu0 %1148
        %v1151 = vsel %vm238, %v1149, 0.0
        %1152 = vadd.xlane.f32.xlu0 %v1151
        %v1153 = vpop.xlane.xlu0 %1152
        %v1154 = vmul.f32 %v1153, 0.083333336
        %v1155 = vsel %vm321, %v1082, %v1097
        %v1156 = vsel %vm323, %v1155, %v1107
        %v1157 = vsel %vm325, %v1156, %v1117
        %v1158 = vsel %vm327, %v1157, %v1127
        %v1159 = vsel %vm329, %v1158, %v1137
        %v1160 = vsel %vm331, %v1159, %v1147
        %v1163 = vunpack.c.l.s4 1966171168
        %v1164 = vunpack.c.0.s8 %v1163
        %v1165 = vlaneseq
        %v1166 = vshrl.u32 %v1165, 7
        %v1167 = vsub.s32 %v1164, %v1166
        %v1168 = vrot.slane %v1160, %v1167
        %v1169 = vcombine.high %v1168, %v1168
        %v1171 = vunpack.c.l.s4 1966171168
        %v1172 = vunpack.c.0.s8 %v1171
        %v1173 = vlaneseq
        %v1174 = vshrl.u32 %v1173, 7
        %v1175 = vsub.s32 %v1172, %v1174
        %v1176 = vrot.slane %v1168, %v1175
        %v1178 = vunpack.c.l.s4 1966171168
        %v1179 = vunpack.c.0.s8 %v1178
        %v1180 = vlaneseq
        %v1181 = vshrl.u32 %v1180, 7
        %v1182 = vsub.s32 %v1179, %v1181
        %v1183 = vrot.slane %v1169, %v1182
        %v1184 = vcombine.high %v1176, %v1176
        %v1185 = vcombine.high %v1183, %v1183
        %v1186 = vsel %vm321, %v1094, %v1104
        %v1187 = vsel %vm323, %v1186, %v1114
        %v1188 = vsel %vm325, %v1187, %v1124
        %v1189 = vsel %vm327, %v1188, %v1134
        %v1190 = vsel %vm329, %v1189, %v1144
        %v1191 = vsel %vm331, %v1190, %v1154
        %v1194 = vunpack.c.l.s4 1966171168
        %v1195 = vunpack.c.0.s8 %v1194
        %v1196 = vlaneseq
        %v1197 = vshrl.u32 %v1196, 7
        %v1198 = vsub.s32 %v1195, %v1197
        %v1199 = vrot.slane %v1191, %v1198
        %v1200 = vcombine.high %v1199, %v1199
        %v1202 = vunpack.c.l.s4 1966171168
        %v1203 = vunpack.c.0.s8 %v1202
        %v1204 = vlaneseq
        %v1205 = vshrl.u32 %v1204, 7
        %v1206 = vsub.s32 %v1203, %v1205
        %v1207 = vrot.slane %v1199, %v1206
        %v1209 = vunpack.c.l.s4 1966171168
        %v1210 = vunpack.c.0.s8 %v1209
        %v1211 = vlaneseq
        %v1212 = vshrl.u32 %v1211, 7
        %v1213 = vsub.s32 %v1210, %v1212
        %v1214 = vrot.slane %v1200, %v1213
        %v1215 = vcombine.high %v1207, %v1207
        %v1216 = vcombine.high %v1214, %v1214
        %v1217 = vlaneseq
        %v1218 = vshrl.u32 %v1217, 7
        %v1219 = vsub.s32 0, %v1218
        %v1220 = vrot.slane %v561, %v1219
        %v1221 = vlaneseq
        %v1222 = vshrl.u32 %v1221, 7
        %v1223 = vsub.s32 0, %v1222
        %v1224 = vrot.slane %v568, %v1223
        %v1225 = vlaneseq
        %v1226 = vshrl.u32 %v1225, 7
        %v1227 = vsub.s32 0, %v1226
        %v1228 = vrot.slane %v569, %v1227
        %v1229 = vlaneseq
        %v1230 = vshrl.u32 %v1229, 7
        %v1231 = vsub.s32 0, %v1230
        %v1232 = vrot.slane %v570, %v1231
        %v1237 = vlaneseq
        %v1238 = vshrl.u32 %v1237, 7
        %v1239 = vsub.s32 0, %v1238
        %v1240 = vrot.slane %v766, %v1239
        %v1241 = vlaneseq
        %v1242 = vshrl.u32 %v1241, 7
        %v1243 = vsub.s32 0, %v1242
        %v1244 = vrot.slane %v773, %v1243
        %v1245 = vlaneseq
        %v1246 = vshrl.u32 %v1245, 7
        %v1247 = vsub.s32 0, %v1246
        %v1248 = vrot.slane %v774, %v1247
        %v1249 = vlaneseq
        %v1250 = vshrl.u32 %v1249, 7
        %v1251 = vsub.s32 0, %v1250
        %v1252 = vrot.slane %v775, %v1251
        %v1257 = vlaneseq
        %v1258 = vshrl.u32 %v1257, 7
        %v1259 = vsub.s32 0, %v1258
        %v1260 = vrot.slane %v971, %v1259
        %v1261 = vlaneseq
        %v1262 = vshrl.u32 %v1261, 7
        %v1263 = vsub.s32 0, %v1262
        %v1264 = vrot.slane %v978, %v1263
        %v1265 = vlaneseq
        %v1266 = vshrl.u32 %v1265, 7
        %v1267 = vsub.s32 0, %v1266
        %v1268 = vrot.slane %v979, %v1267
        %v1269 = vlaneseq
        %v1270 = vshrl.u32 %v1269, 7
        %v1271 = vsub.s32 0, %v1270
        %v1272 = vrot.slane %v980, %v1271
        %v1277 = vlaneseq
        %v1278 = vshrl.u32 %v1277, 7
        %v1279 = vsub.s32 0, %v1278
        %v1280 = vrot.slane %v1176, %v1279
        %v1281 = vlaneseq
        %v1282 = vshrl.u32 %v1281, 7
        %v1283 = vsub.s32 0, %v1282
        %v1284 = vrot.slane %v1183, %v1283
        %v1285 = vlaneseq
        %v1286 = vshrl.u32 %v1285, 7
        %v1287 = vsub.s32 0, %v1286
        %v1288 = vrot.slane %v1184, %v1287
        %v1289 = vlaneseq
        %v1290 = vshrl.u32 %v1289, 7
        %v1291 = vsub.s32 0, %v1290
        %v1292 = vrot.slane %v1185, %v1291
        %vm1297 = vcmask 1040384
        %v1298 = vsel %vm1297, %v348, %v1220
        %v1299 = vsel %vm1297, %v355, %v1224
        %v1300 = vsel %vm1297, %v356, %v1228
        %v1301 = vsel %vm1297, %v357, %v1232
        %vm1302 = vcmask 1041408
        %v1303 = vsel %vm1302, %v1298, %v1240
        %v1304 = vsel %vm1302, %v1299, %v1244
        %v1305 = vsel %vm1302, %v1300, %v1248
        %v1306 = vsel %vm1302, %v1301, %v1252
        %vm1307 = vcmask 1042432
        %v1308 = vsel %vm1307, %v1303, %v1260
        %v1309 = vsel %vm1307, %v1304, %v1264
        %v1310 = vsel %vm1307, %v1305, %v1268
        %v1311 = vsel %vm1307, %v1306, %v1272
        %vm1312 = vcmask 1043456
        %v1313 = vsel %vm1312, %v1308, %v1280
        %v1314 = vsel %vm1312, %v1309, %v1284
        %v1315 = vsel %vm1312, %v1310, %v1288
        %v1316 = vsel %vm1312, %v1311, %v1292
        %v1317 = vlaneseq
        %v1318 = vshrl.u32 %v1317, 7
        %v1319 = vsub.s32 0, %v1318
        %v1320 = vrot.slane %v592, %v1319
        %v1321 = vlaneseq
        %v1322 = vshrl.u32 %v1321, 7
        %v1323 = vsub.s32 0, %v1322
        %v1324 = vrot.slane %v599, %v1323
        %v1325 = vlaneseq
        %v1326 = vshrl.u32 %v1325, 7
        %v1327 = vsub.s32 0, %v1326
        %v1328 = vrot.slane %v600, %v1327
        %v1329 = vlaneseq
        %v1330 = vshrl.u32 %v1329, 7
        %v1331 = vsub.s32 0, %v1330
        %v1332 = vrot.slane %v601, %v1331
        %v1337 = vlaneseq
        %v1338 = vshrl.u32 %v1337, 7
        %v1339 = vsub.s32 0, %v1338
        %v1340 = vrot.slane %v797, %v1339
        %v1341 = vlaneseq
        %v1342 = vshrl.u32 %v1341, 7
        %v1343 = vsub.s32 0, %v1342
        %v1344 = vrot.slane %v804, %v1343
        %v1345 = vlaneseq
        %v1346 = vshrl.u32 %v1345, 7
        %v1347 = vsub.s32 0, %v1346
        %v1348 = vrot.slane %v805, %v1347
        %v1349 = vlaneseq
        %v1350 = vshrl.u32 %v1349, 7
        %v1351 = vsub.s32 0, %v1350
        %v1352 = vrot.slane %v806, %v1351
        %v1357 = vlaneseq
        %v1358 = vshrl.u32 %v1357, 7
        %v1359 = vsub.s32 0, %v1358
        %v1360 = vrot.slane %v1002, %v1359
        %v1361 = vlaneseq
        %v1362 = vshrl.u32 %v1361, 7
        %v1363 = vsub.s32 0, %v1362
        %v1364 = vrot.slane %v1009, %v1363
        %v1365 = vlaneseq
        %v1366 = vshrl.u32 %v1365, 7
        %v1367 = vsub.s32 0, %v1366
        %v1368 = vrot.slane %v1010, %v1367
        %v1369 = vlaneseq
        %v1370 = vshrl.u32 %v1369, 7
        %v1371 = vsub.s32 0, %v1370
        %v1372 = vrot.slane %v1011, %v1371
        %v1377 = vlaneseq
        %v1378 = vshrl.u32 %v1377, 7
        %v1379 = vsub.s32 0, %v1378
        %v1380 = vrot.slane %v1207, %v1379
        %v1381 = vlaneseq
        %v1382 = vshrl.u32 %v1381, 7
        %v1383 = vsub.s32 0, %v1382
        %v1384 = vrot.slane %v1214, %v1383
        %v1385 = vlaneseq
        %v1386 = vshrl.u32 %v1385, 7
        %v1387 = vsub.s32 0, %v1386
        %v1388 = vrot.slane %v1215, %v1387
        %v1389 = vlaneseq
        %v1390 = vshrl.u32 %v1389, 7
        %v1391 = vsub.s32 0, %v1390
        %v1392 = vrot.slane %v1216, %v1391
        %v1397 = vsel %vm1297, %v383, %v1320
        %v1398 = vsel %vm1297, %v390, %v1324
        %v1399 = vsel %vm1297, %v391, %v1328
        %v1400 = vsel %vm1297, %v392, %v1332
        %v1401 = vsel %vm1302, %v1397, %v1340
        %v1402 = vsel %vm1302, %v1398, %v1344
        %v1403 = vsel %vm1302, %v1399, %v1348
        %v1404 = vsel %vm1302, %v1400, %v1352
        %v1405 = vsel %vm1307, %v1401, %v1360
        %v1406 = vsel %vm1307, %v1402, %v1364
        %v1407 = vsel %vm1307, %v1403, %v1368
        %v1408 = vsel %vm1307, %v1404, %v1372
        %v1409 = vsel %vm1312, %v1405, %v1380
        %v1410 = vsel %vm1312, %v1406, %v1384
        %v1411 = vsel %vm1312, %v1407, %v1388
        %v1412 = vsel %vm1312, %v1408, %v1392
        %vm1413 = vcmask 53248
        %1414 = vst.msk [vmem:[%s164] sm:$0x1f] %vm1413, %v1313
        %1415 = vst.msk [vmem:[%s164 + $0x8] sm:$0x1f] %vm1413, %v1314
        %1416 = vst.msk [vmem:[%s164 + $0x10] sm:$0x1f] %vm1413, %v1315
        %1417 = vst.msk [vmem:[%s164 + $0x18] sm:$0x1f] %vm1413, %v1316
        %s1418 = scalar_lea.vmem %s164, 32
        %1419 = vst.msk [vmem:[%s1418] sm:$0x1f] %vm1413, %v1409
        %1420 = vst.msk [vmem:[%s1418 + $0x8] sm:$0x1f] %vm1413, %v1410
        %1421 = vst.msk [vmem:[%s1418 + $0x10] sm:$0x1f] %vm1413, %v1411
        %1422 = vst.msk [vmem:[%s1418 + $0x18] sm:$0x1f] %vm1413, %v1412
        %s1423 = smul.u32 4, %s20
        %p1424 = scmp.lt.s32.totalorder %s19, 1
        %s1425 = scalar_select %p1424, %s19, 1
        %p1426 = scmp.lt.s32.totalorder %s1423, 3
        %s1427 = scalar_select %p1426, %s1423, 3
        %s1428 = smul.addr %s1425, 8
        %s1429 = sadd.s32 %s1427, %s1428
        %s1430 = smul.addr %s1429, 8
        %s1431 = scalar_lea.vmem %s1, %s1430
        // Predicated region
        $region29: #{tpu_custom_call.1} parent=23 // pred_check
          %p1432 = pneg %p75
        $region30: #{tpu_custom_call.1} parent=23 // pred_check_branch
          %1434 = sbr.rel (%p1432) target = $region32
        $region31: #{tpu_custom_call.1} parent=23 // pred_region
          %s1435 = smul.u32 4, %s20
        $region32: #{tpu_custom_call.1} parent=23 // pred_fallthru
          _
      $region24: #{tpu_custom_call.1} parent=5 // pred_fallthru
        _
      %p1436 = scmp.le.s32.totalorder 2, %s10
      // Predicated region
      $region33: #{tpu_custom_call.1} parent=5 // pred_check
        %p1437 = pneg %p1436
      $region34: #{tpu_custom_call.1} parent=5 // pred_check_branch
        %1439 = sbr.rel (%p1437) target = $region36
      $region35: #{tpu_custom_call.1} parent=5 // pred_region
        %s1440 = ssub.s32 %s10, 2
        // Predicated region
        $region37: #{tpu_custom_call.1} parent=35 // pred_check
          %p1441 = pneg %p81
        $region38: #{tpu_custom_call.1} parent=35 // pred_check_branch
          %1443 = sbr.rel (%p1441) target = $region40
        $region39: #{tpu_custom_call.1} parent=35 // pred_region
          %s1444 = smul.u32 4, %s22
          %p1445 = scmp.lt.s32.totalorder %s21, 1
          %s1446 = scalar_select %p1445, %s21, 1
          %p1447 = scmp.lt.s32.totalorder %s1444, 3
          %s1448 = scalar_select %p1447, %s1444, 3
          %s1449 = smul.addr %s1446, 8
          %s1450 = sadd.s32 %s1448, %s1449
          %s1451 = smul.addr %s1450, 8
          %s1452 = scalar_lea.vmem %s1, %s1451
        $region40: #{tpu_custom_call.1} parent=35 // pred_fallthru
          _
      $region36: #{tpu_custom_call.1} parent=5 // pred_fallthru
        _
    $region6: #{tpu_custom_call.1} parent=1 // loop_footer
      %s14 = sadd.s32 1, %s10
    $region7: #{tpu_custom_call.1} parent=1 // loop_footer_branch
      %9 = sbr.rel target = $region3
    $region8: #{tpu_custom_call.1} parent=1 // loop_exit
      _
    %1453 = vsyncpa [#allocation3], 1
    %s1454 = scalar_lea.sflag [#allocation3], 1
    %1455 = vsyncpa %s1454, 1

</llo_original>
